<compile_context>
chip_gen: v7x
topology: tpu7x:2x2x1
jax: 0.10.0
libtpu: 0.0.40
codegen_flags: <defaults>
</compile_context>

<pallas_src>
import jax
import jax.numpy as jnp
from jax.experimental import pallas as pl
from jax.experimental.pallas import tpu as pltpu


def _round_up(x, m):
    return ((x + m - 1) // m) * m


def _pad_rows(x, rows):
    t = x.shape[0]
    if t == rows:
        return x
    return jnp.pad(x, ((0, rows - t), (0, 0)))


# ----------------------------- Pallas kernel ------------------------------ #
def _gconv_mlp_kernel(sub_ref, rel_ref, obj_ref,
                      w1s_ref, w1r_ref, w1o_ref, b1_ref,
                      w2s_ref, w2r_ref, w2o_ref, b2s_ref, b2r_ref, b2o_ref,
                      sub_o_ref, rel_o_ref, obj_o_ref):
    # First Linear, split along the concatenated input so every operand is a
    # clean lane-dense slab (feat / embed / feat wide) -- no concat needed.
    h = jnp.dot(sub_ref[...], w1s_ref[...], preferred_element_type=jnp.float32)
    h = h + jnp.dot(rel_ref[...], w1r_ref[...], preferred_element_type=jnp.float32)
    h = h + jnp.dot(obj_ref[...], w1o_ref[...], preferred_element_type=jnp.float32)
    h = jnp.maximum(h + b1_ref[...], 0.0)          # bias + ReLU in f32
    hb = h.astype(jnp.bfloat16)                    # bf16 back into the MXU
    # Second Linear, split along output columns -> three lane-dense outputs.
    sub_o_ref[...] = jnp.dot(hb, w2s_ref[...], preferred_element_type=jnp.float32) + b2s_ref[...]
    rel_o_ref[...] = jnp.dot(hb, w2r_ref[...], preferred_element_type=jnp.float32) + b2r_ref[...]
    obj_o_ref[...] = jnp.dot(hb, w2o_ref[...], preferred_element_type=jnp.float32) + b2o_ref[...]


def gconv_mlp(sub, rel, obj, w1, b1, w2, b2, *, tm_max=256):
    """Fused Linear -> ReLU -> Linear over gathered triplet rows.

    sub/obj: (T, F) f32, rel: (T, E) f32
    w1: (F+E+F, H), b1: (1, H), w2: (H, F+E+F), b2: (1, F+E+F)
    Returns (sub_out (T,F), rel_out (T,E), obj_out (T,F)) in f32.
    """
    T, F = sub.shape
    E = rel.shape[1]
    H = w1.shape[1]

    # Row tile: up to 256 (full MXU height on v6e/v7x), 128-aligned.
    tm = min(tm_max, _round_up(max(T, 1), 128))
    t_pad = _round_up(max(T, 1), tm)
    grid = (t_pad // tm,)
    # NOTE: at production sizes (feat=2048, embed=1024, hidden=2048) cap tm /
    # set vmem_limit_bytes against the v7x 64 MiB VMEM budget; at these sizes
    # the defaults are ample.

    bf = jnp.bfloat16
    # Split weights into lane-dense row / column blocks; cast MXU operands to bf16.
    w1s, w1r, w1o = w1[:F].astype(bf), w1[F:F + E].astype(bf), w1[F + E:].astype(bf)
    w2s, w2r, w2o = w2[:, :F].astype(bf), w2[:, F:F + E].astype(bf), w2[:, F + E:].astype(bf)
    b2s, b2r, b2o = b2[:, :F], b2[:, F:F + E], b2[:, F + E:]

    sub_p = _pad_rows(sub, t_pad).astype(bf)
    rel_p = _pad_rows(rel, t_pad).astype(bf)
    obj_p = _pad_rows(obj, t_pad).astype(bf)

    row_f = pl.BlockSpec((tm, F), lambda i: (i, 0))
    row_e = pl.BlockSpec((tm, E), lambda i: (i, 0))

    def const(shape):
        return pl.BlockSpec(shape, lambda i: (0, 0))

    sub_out, rel_out, obj_out = pl.pallas_call(
        _gconv_mlp_kernel,
        out_shape=(jax.ShapeDtypeStruct((t_pad, F), jnp.float32),
                   jax.ShapeDtypeStruct((t_pad, E), jnp.float32),
                   jax.ShapeDtypeStruct((t_pad, F), jnp.float32)),
        grid=grid,
        in_specs=[row_f, row_e, row_f,
                  const((F, H)), const((E, H)), const((F, H)), const((1, H)),
                  const((H, F)), const((H, E)), const((H, F)),
                  const((1, F)), const((1, E)), const((1, F))],
        out_specs=(row_f, row_e, row_f),
        compiler_params=pltpu.CompilerParams(
            dimension_semantics=("parallel",)),
    )(sub_p, rel_p, obj_p,
      w1s, w1r, w1o, b1,
      w2s, w2r, w2o, b2s, b2r, b2o)

    return sub_out[:T], rel_out[:T], obj_out[:T]


# ------------------------------ JAX glue ---------------------------------- #
def _scene_graph_glue(params, obj_feats, pairs, relationship, pair_lens, mlp_fn):
    """Shared gather / scatter-add / normalize / residual glue around the MLP.

    obj_feats: (B, O, F); pairs: (B, R, 3) int32 (col 0 = subject, col 1 = object
    -- faithful to the reference GConv, col 2 unused); relationship: (B, R) int32.
    pair_lens: optional (B,) int32 (None == use all R rows, as triplet_len=None).
    """
    B, O, F = obj_feats.shape
    R = pairs.shape[1]
    E = params["rel_emb"].shape[1]

    if pair_lens is None:
        valid = jnp.ones((B, R), jnp.float32)
    else:
        valid = (jnp.arange(R)[None, :] < pair_lens[:, None]).astype(jnp.float32)

    offs = (jnp.arange(B, dtype=pairs.dtype) * O)[:, None]
    subs = (pairs[:, :, 0] + offs).reshape(-1)              # (B*R,)
    objs = (pairs[:, :, 1] + offs).reshape(-1)              # col 1 = object index in GConv
    obj_flat = obj_feats.reshape(B * O, F)

    sub_g = obj_flat[subs]                                  # (B*R, F)
    obj_g = obj_flat[objs]                                  # (B*R, F)
    rel_g = params["rel_emb"][relationship.reshape(-1)]     # (B*R, E)

    sub_out, rel_out, obj_out = mlp_fn(sub_g, rel_g, obj_g, params)

    m = valid.reshape(-1)
    cnt = (jnp.zeros((B * O,), jnp.float32).at[subs].add(m).at[objs].add(m))
    acc = (jnp.zeros((B * O, F), jnp.float32)
           .at[subs].add(sub_out * m[:, None])
           .at[objs].add(obj_out * m[:, None]))
    out = acc / jnp.clip(cnt, 1.0, None)[:, None] + obj_flat
    return out.reshape(B, O, F), rel_out.reshape(B, R, E)


def gcn_unit_forward(params, obj_feats, pairs, relationship, pair_lens=None):
    """GCN_unit.forward: returns (updated object feats, rel_out).  The PyTorch
    module returns only the object feats; rel_out is provided for completeness."""
    def mlp(sub_g, rel_g, obj_g, p):
        return gconv_mlp(sub_g, rel_g, obj_g, p["w1"], p["b1"], p["w2"], p["b2"])
    return _scene_graph_glue(params, obj_feats, pairs, relationship, pair_lens, mlp)


def reference_forward(params, obj_feats, pairs, relationship, pair_lens=None):
    """Pure-JAX f32 reference (concat -> Linear -> ReLU -> Linear)."""
    F = obj_feats.shape[-1]
    E = params["rel_emb"].shape[-1]

    def mlp(sub_g, rel_g, obj_g, p):
        x = jnp.concatenate([sub_g, rel_g, obj_g], axis=1)
        h = jnp.maximum(x @ p["w1"] + p["b1"], 0.0)
        y = h @ p["w2"] + p["b2"]
        return y[:, :F], y[:, F:F + E], y[:, F + E:]

    return _scene_graph_glue(params, obj_feats, pairs, relationship, pair_lens, mlp)


def init_params(key, feat_dim, embed_dim, hidden_dim, rel_num):
    """Synthetic init matching the PyTorch module's parameter shapes."""
    D = feat_dim + embed_dim + feat_dim      # sum(input_dim), use_relation=True
    k1, k2, k3, k4, k5 = jax.random.split(key, 5)
    rel_emb = jax.random.normal(k1, (rel_num + 1, embed_dim), jnp.float32)  # nn.Embedding(rel_cnt+1)
    # kaiming_normal_ (fan_in) on the Linear weights
    w1 = jax.random.normal(k2, (D, hidden_dim), jnp.float32) * jnp.sqrt(2.0 / D)
    w2 = jax.random.normal(k3, (hidden_dim, D), jnp.float32) * jnp.sqrt(2.0 / hidden_dim)
    # nn.Linear default bias ~ U(-1/sqrt(fan_in), 1/sqrt(fan_in))
    b1 = jax.random.uniform(k4, (1, hidden_dim), jnp.float32,
                            -1.0 / jnp.sqrt(D), 1.0 / jnp.sqrt(D))
    b2 = jax.random.uniform(k5, (1, D), jnp.float32,
                            -1.0 / jnp.sqrt(hidden_dim), 1.0 / jnp.sqrt(hidden_dim))
    return dict(rel_emb=rel_emb, w1=w1, b1=b1, w2=w2, b2=b2)


# --------------------------------- main ------------------------------------ #
if __name__ == "__main__":
    key = jax.random.PRNGKey(0)
    B, O, R = 2, 8, 8                         # batch, objects per image, triplets
    feat_dim, embed_dim, hidden_dim = 128, 64, 128
    rel_num = 20

    kp, kf, ks, ko, kc, kr = jax.random.split(key, 6)
    params = init_params(kp, feat_dim, embed_dim, hidden_dim, rel_num)

    obj_feats = jax.random.normal(kf, (B, O, feat_dim), jnp.float32)
    subs = jax.random.randint(ks, (B, R, 1), 0, O, dtype=jnp.int32)
    objs = jax.random.randint(ko, (B, R, 1), 0, O, dtype=jnp.int32)
    col2 = jax.random.randint(kc, (B, R, 1), 0, rel_num, dtype=jnp.int32)   # unused by GConv
    pairs = jnp.concatenate([subs, objs, col2], axis=-1)                    # (B, R, 3)
    relationship = jax.random.randint(kr, (B, R), 0, rel_num + 1, dtype=jnp.int32)
    pair_lens = jnp.array([R, 5], dtype=jnp.int32)   # device array -> no recompiles per length

    fwd = jax.jit(gcn_unit_forward)
    out_feats, rel_out = fwd(params, obj_feats, pairs, relationship, pair_lens)
    jax.block_until_ready((out_feats, rel_out))

    ref_feats, ref_rel = reference_forward(params, obj_feats, pairs, relationship, pair_lens)
    assert out_feats.shape == (B, O, feat_dim)
    assert rel_out.shape == (B, R, embed_dim)
    assert jnp.allclose(out_feats, ref_feats, atol=1e-1, rtol=1e-1), "feat mismatch vs f32 reference"
    assert jnp.allclose(rel_out, ref_rel, atol=1e-1, rtol=1e-1), "rel mismatch vs f32 reference"
    print("KERNEL_OK")
</pallas_src>

<mosaic_0001>
module attributes {stable_mosaic.version = 11 : i64} {
  func.func private @main(%arg0: i32) attributes {dimension_semantics = [#tpu.dimension_semantics<core_parallel>], iteration_bounds = array<i64: 2>, tpu.core_type = #tpu.core_type<sc_scalar_subcore>, window_params = []} {
    return
  }
}

module attributes {stable_mosaic.version = 11 : i64} {
  func.func private @main(%arg0: i32) attributes {dimension_semantics = [#tpu.dimension_semantics<core_parallel>], iteration_bounds = array<i64: 2>, tpu.core_type = #tpu.core_type<sc_scalar_subcore>, window_params = []} {
    return
  }
}

module attributes {stable_mosaic.version = 11 : i64} {
  func.func @_gconv_mlp_kernel(%arg0: i32, %arg1: memref<128x128xbf16, #tpu.memory_space<vmem>>, %arg2: memref<128x64xbf16, #tpu.memory_space<vmem>>, %arg3: memref<128x128xbf16, #tpu.memory_space<vmem>>, %arg4: memref<128x128xbf16, #tpu.memory_space<vmem>>, %arg5: memref<64x128xbf16, #tpu.memory_space<vmem>>, %arg6: memref<128x128xbf16, #tpu.memory_space<vmem>>, %arg7: memref<1x128xf32, #tpu.memory_space<vmem>>, %arg8: memref<128x128xbf16, #tpu.memory_space<vmem>>, %arg9: memref<128x64xbf16, #tpu.memory_space<vmem>>, %arg10: memref<128x128xbf16, #tpu.memory_space<vmem>>, %arg11: memref<1x128xf32, #tpu.memory_space<vmem>>, %arg12: memref<1x64xf32, #tpu.memory_space<vmem>>, %arg13: memref<1x128xf32, #tpu.memory_space<vmem>>, %arg14: memref<128x128xf32, #tpu.memory_space<vmem>>, %arg15: memref<128x64xf32, #tpu.memory_space<vmem>>, %arg16: memref<128x128xf32, #tpu.memory_space<vmem>>) attributes {dimension_semantics = [#tpu.dimension_semantics<parallel>], iteration_bounds = array<i64: 1>, scalar_prefetch = 0 : i64, scratch_operands = 0 : i64, tpu.core_type = #tpu.core_type<tc>, window_params = [{transform_indices = @transform_0, window_bounds = array<i64: 128, 128>}, {transform_indices = @transform_1, window_bounds = array<i64: 128, 64>}, {transform_indices = @transform_2, window_bounds = array<i64: 128, 128>}, {pipeline_mode = #tpu.pipeline_mode<synchronous>, transform_indices = @transform_3, window_bounds = array<i64: 128, 128>}, {pipeline_mode = #tpu.pipeline_mode<synchronous>, transform_indices = @transform_4, window_bounds = array<i64: 64, 128>}, {pipeline_mode = #tpu.pipeline_mode<synchronous>, transform_indices = @transform_5, window_bounds = array<i64: 128, 128>}, {pipeline_mode = #tpu.pipeline_mode<synchronous>, transform_indices = @transform_6, window_bounds = array<i64: 1, 128>}, {pipeline_mode = #tpu.pipeline_mode<synchronous>, transform_indices = @transform_7, window_bounds = array<i64: 128, 128>}, {pipeline_mode = #tpu.pipeline_mode<synchronous>, transform_indices = @transform_8, window_bounds = array<i64: 128, 64>}, {pipeline_mode = #tpu.pipeline_mode<synchronous>, transform_indices = @transform_9, window_bounds = array<i64: 128, 128>}, {pipeline_mode = #tpu.pipeline_mode<synchronous>, transform_indices = @transform_10, window_bounds = array<i64: 1, 128>}, {pipeline_mode = #tpu.pipeline_mode<synchronous>, transform_indices = @transform_11, window_bounds = array<i64: 1, 64>}, {pipeline_mode = #tpu.pipeline_mode<synchronous>, transform_indices = @transform_12, window_bounds = array<i64: 1, 128>}, {transform_indices = @transform_13, window_bounds = array<i64: 128, 128>}, {transform_indices = @transform_14, window_bounds = array<i64: 128, 64>}, {transform_indices = @transform_15, window_bounds = array<i64: 128, 128>}]} {
    %c0 = arith.constant 0 : index
    %c0_0 = arith.constant 0 : index
    %0 = vector.load %arg1[%c0, %c0_0] : memref<128x128xbf16, #tpu.memory_space<vmem>>, vector<128x128xbf16>
    %c0_1 = arith.constant 0 : index
    %c0_2 = arith.constant 0 : index
    %1 = vector.load %arg4[%c0_1, %c0_2] : memref<128x128xbf16, #tpu.memory_space<vmem>>, vector<128x128xbf16>
    %cst = arith.constant dense<0.000000e+00> : vector<128x128xf32>
    %2 = tpu.matmul %0, %1, %cst {dimension_numbers = #tpu.dot_dimension_numbers<[1], [0], [0], [1], [0, 0, 1, 1], [], []>} : vector<128x128xbf16>, vector<128x128xbf16>, vector<128x128xf32> -> vector<128x128xf32>
    %c0_3 = arith.constant 0 : index
    %c0_4 = arith.constant 0 : index
    %3 = vector.load %arg2[%c0_3, %c0_4] : memref<128x64xbf16, #tpu.memory_space<vmem>>, vector<128x64xbf16>
    %c0_5 = arith.constant 0 : index
    %c0_6 = arith.constant 0 : index
    %4 = vector.load %arg5[%c0_5, %c0_6] : memref<64x128xbf16, #tpu.memory_space<vmem>>, vector<64x128xbf16>
    %cst_7 = arith.constant dense<0.000000e+00> : vector<128x128xf32>
    %5 = tpu.matmul %3, %4, %cst_7 {dimension_numbers = #tpu.dot_dimension_numbers<[1], [0], [0], [1], [0, 0, 1, 1], [], []>} : vector<128x64xbf16>, vector<64x128xbf16>, vector<128x128xf32> -> vector<128x128xf32>
    %6 = arith.addf %2, %5 : vector<128x128xf32>
    %c0_8 = arith.constant 0 : index
    %c0_9 = arith.constant 0 : index
    %7 = vector.load %arg3[%c0_8, %c0_9] : memref<128x128xbf16, #tpu.memory_space<vmem>>, vector<128x128xbf16>
    %c0_10 = arith.constant 0 : index
    %c0_11 = arith.constant 0 : index
    %8 = vector.load %arg6[%c0_10, %c0_11] : memref<128x128xbf16, #tpu.memory_space<vmem>>, vector<128x128xbf16>
    %cst_12 = arith.constant dense<0.000000e+00> : vector<128x128xf32>
    %9 = tpu.matmul %7, %8, %cst_12 {dimension_numbers = #tpu.dot_dimension_numbers<[1], [0], [0], [1], [0, 0, 1, 1], [], []>} : vector<128x128xbf16>, vector<128x128xbf16>, vector<128x128xf32> -> vector<128x128xf32>
    %10 = arith.addf %6, %9 : vector<128x128xf32>
    %c0_13 = arith.constant 0 : index
    %c0_14 = arith.constant 0 : index
    %11 = vector.load %arg7[%c0_13, %c0_14] : memref<1x128xf32, #tpu.memory_space<vmem>>, vector<1x128xf32>
    %12 = vector.broadcast %11 : vector<1x128xf32> to vector<128x128xf32>
    %13 = arith.addf %10, %12 : vector<128x128xf32>
    %cst_15 = arith.constant 0.000000e+00 : f32
    %14 = vector.broadcast %cst_15 : f32 to vector<128x128xf32>
    %15 = arith.maximumf %13, %14 : vector<128x128xf32>
    %16 = arith.truncf %15 : vector<128x128xf32> to vector<128x128xbf16>
    %c0_16 = arith.constant 0 : index
    %c0_17 = arith.constant 0 : index
    %17 = vector.load %arg8[%c0_16, %c0_17] : memref<128x128xbf16, #tpu.memory_space<vmem>>, vector<128x128xbf16>
    %cst_18 = arith.constant dense<0.000000e+00> : vector<128x128xf32>
    %18 = tpu.matmul %16, %17, %cst_18 {dimension_numbers = #tpu.dot_dimension_numbers<[1], [0], [0], [1], [0, 0, 1, 1], [], []>} : vector<128x128xbf16>, vector<128x128xbf16>, vector<128x128xf32> -> vector<128x128xf32>
    %c0_19 = arith.constant 0 : index
    %c0_20 = arith.constant 0 : index
    %19 = vector.load %arg11[%c0_19, %c0_20] : memref<1x128xf32, #tpu.memory_space<vmem>>, vector<1x128xf32>
    %20 = vector.broadcast %19 : vector<1x128xf32> to vector<128x128xf32>
    %21 = arith.addf %18, %20 : vector<128x128xf32>
    %c0_21 = arith.constant 0 : index
    %c0_22 = arith.constant 0 : index
    %22 = vector.load %arg14[%c0_21, %c0_22] : memref<128x128xf32, #tpu.memory_space<vmem>>, vector<128x128xf32>
    tpu.vector_store %arg14[%c0_21, %c0_22], %21 {strides = array<i32>} : memref<128x128xf32, #tpu.memory_space<vmem>>, vector<128x128xf32>,
    %c0_23 = arith.constant 0 : index
    %c0_24 = arith.constant 0 : index
    %23 = vector.load %arg9[%c0_23, %c0_24] : memref<128x64xbf16, #tpu.memory_space<vmem>>, vector<128x64xbf16>
    %cst_25 = arith.constant dense<0.000000e+00> : vector<128x64xf32>
    %24 = tpu.matmul %16, %23, %cst_25 {dimension_numbers = #tpu.dot_dimension_numbers<[1], [0], [0], [1], [0, 0, 1, 1], [], []>} : vector<128x128xbf16>, vector<128x64xbf16>, vector<128x64xf32> -> vector<128x64xf32>
    %c0_26 = arith.constant 0 : index
    %c0_27 = arith.constant 0 : index
    %25 = vector.load %arg12[%c0_26, %c0_27] : memref<1x64xf32, #tpu.memory_space<vmem>>, vector<1x64xf32>
    %26 = vector.broadcast %25 : vector<1x64xf32> to vector<128x64xf32>
    %27 = arith.addf %24, %26 : vector<128x64xf32>
    %c0_28 = arith.constant 0 : index
    %c0_29 = arith.constant 0 : index
    %28 = vector.load %arg15[%c0_28, %c0_29] : memref<128x64xf32, #tpu.memory_space<vmem>>, vector<128x64xf32>
    tpu.vector_store %arg15[%c0_28, %c0_29], %27 {strides = array<i32>} : memref<128x64xf32, #tpu.memory_space<vmem>>, vector<128x64xf32>,
    %c0_30 = arith.constant 0 : index
    %c0_31 = arith.constant 0 : index
    %29 = vector.load %arg10[%c0_30, %c0_31] : memref<128x128xbf16, #tpu.memory_space<vmem>>, vector<128x128xbf16>
    %cst_32 = arith.constant dense<0.000000e+00> : vector<128x128xf32>
    %30 = tpu.matmul %16, %29, %cst_32 {dimension_numbers = #tpu.dot_dimension_numbers<[1], [0], [0], [1], [0, 0, 1, 1], [], []>} : vector<128x128xbf16>, vector<128x128xbf16>, vector<128x128xf32> -> vector<128x128xf32>
    %c0_33 = arith.constant 0 : index
    %c0_34 = arith.constant 0 : index
    %31 = vector.load %arg13[%c0_33, %c0_34] : memref<1x128xf32, #tpu.memory_space<vmem>>, vector<1x128xf32>
    %32 = vector.broadcast %31 : vector<1x128xf32> to vector<128x128xf32>
    %33 = arith.addf %30, %32 : vector<128x128xf32>
    %c0_35 = arith.constant 0 : index
    %c0_36 = arith.constant 0 : index
    %34 = vector.load %arg16[%c0_35, %c0_36] : memref<128x128xf32, #tpu.memory_space<vmem>>, vector<128x128xf32>
    tpu.vector_store %arg16[%c0_35, %c0_36], %33 {strides = array<i32>} : memref<128x128xf32, #tpu.memory_space<vmem>>, vector<128x128xf32>,
    return
  }
  func.func @transform_0(%arg0: i32) -> (i32, i32) {
    %c0_i32 = arith.constant 0 : i32
    %c0_i32_0 = arith.constant 0 : i32
    return %arg0, %c0_i32 : i32, i32
  }
  func.func @transform_1(%arg0: i32) -> (i32, i32) {
    %c0_i32 = arith.constant 0 : i32
    %c0_i32_0 = arith.constant 0 : i32
    return %arg0, %c0_i32 : i32, i32
  }
  func.func @transform_2(%arg0: i32) -> (i32, i32) {
    %c0_i32 = arith.constant 0 : i32
    %c0_i32_0 = arith.constant 0 : i32
    return %arg0, %c0_i32 : i32, i32
  }
  func.func @transform_3(%arg0: i32) -> (i32, i32) {
    %c0_i32 = arith.constant 0 : i32
    %c0_i32_0 = arith.constant 0 : i32
    %c0_i32_1 = arith.constant 0 : i32
    return %c0_i32, %c0_i32_0 : i32, i32
  }
  func.func @transform_4(%arg0: i32) -> (i32, i32) {
    %c0_i32 = arith.constant 0 : i32
    %c0_i32_0 = arith.constant 0 : i32
    %c0_i32_1 = arith.constant 0 : i32
    return %c0_i32, %c0_i32_0 : i32, i32
  }
  func.func @transform_5(%arg0: i32) -> (i32, i32) {
    %c0_i32 = arith.constant 0 : i32
    %c0_i32_0 = arith.constant 0 : i32
    %c0_i32_1 = arith.constant 0 : i32
    return %c0_i32, %c0_i32_0 : i32, i32
  }
  func.func @transform_6(%arg0: i32) -> (i32, i32) {
    %c0_i32 = arith.constant 0 : i32
    %c0_i32_0 = arith.constant 0 : i32
    %c0_i32_1 = arith.constant 0 : i32
    return %c0_i32, %c0_i32_0 : i32, i32
  }
  func.func @transform_7(%arg0: i32) -> (i32, i32) {
    %c0_i32 = arith.constant 0 : i32
    %c0_i32_0 = arith.constant 0 : i32
    %c0_i32_1 = arith.constant 0 : i32
    return %c0_i32, %c0_i32_0 : i32, i32
  }
  func.func @transform_8(%arg0: i32) -> (i32, i32) {
    %c0_i32 = arith.constant 0 : i32
    %c0_i32_0 = arith.constant 0 : i32
    %c0_i32_1 = arith.constant 0 : i32
    return %c0_i32, %c0_i32_0 : i32, i32
  }
  func.func @transform_9(%arg0: i32) -> (i32, i32) {
    %c0_i32 = arith.constant 0 : i32
    %c0_i32_0 = arith.constant 0 : i32
    %c0_i32_1 = arith.constant 0 : i32
    return %c0_i32, %c0_i32_0 : i32, i32
  }
  func.func @transform_10(%arg0: i32) -> (i32, i32) {
    %c0_i32 = arith.constant 0 : i32
    %c0_i32_0 = arith.constant 0 : i32
    %c0_i32_1 = arith.constant 0 : i32
    return %c0_i32, %c0_i32_0 : i32, i32
  }
  func.func @transform_11(%arg0: i32) -> (i32, i32) {
    %c0_i32 = arith.constant 0 : i32
    %c0_i32_0 = arith.constant 0 : i32
    %c0_i32_1 = arith.constant 0 : i32
    return %c0_i32, %c0_i32_0 : i32, i32
  }
  func.func @transform_12(%arg0: i32) -> (i32, i32) {
    %c0_i32 = arith.constant 0 : i32
    %c0_i32_0 = arith.constant 0 : i32
    %c0_i32_1 = arith.constant 0 : i32
    return %c0_i32, %c0_i32_0 : i32, i32
  }
  func.func @transform_13(%arg0: i32) -> (i32, i32) {
    %c0_i32 = arith.constant 0 : i32
    %c0_i32_0 = arith.constant 0 : i32
    return %arg0, %c0_i32 : i32, i32
  }
  func.func @transform_14(%arg0: i32) -> (i32, i32) {
    %c0_i32 = arith.constant 0 : i32
    %c0_i32_0 = arith.constant 0 : i32
    return %arg0, %c0_i32 : i32, i32
  }
  func.func @transform_15(%arg0: i32) -> (i32, i32) {
    %c0_i32 = arith.constant 0 : i32
    %c0_i32_0 = arith.constant 0 : i32
    return %arg0, %c0_i32 : i32, i32
  }
}

</mosaic_0001>

<llo_original>
// kernel: gcn_unit_forward.1
$region0: #{gcn_unit_forward.1}
  #allocation0 [shape = 'u32[]', space=smem, size = 0x4, offset = 0x4, fixed_abs, tag = 'smem constant byte address 0x4 - core index']
  #allocation1 [shape = 'u32[144,128]{1,0:T(1,128)}', space=vmem, size = 0x12000, scoped, tag = 'internal scratch']
  %s0 = inlined_call_operand.vmem [shape: bf16[128,128], index: 0, kind: input, shape index: {}]
  %s1 = inlined_call_operand.vmem [shape: bf16[128,64], index: 1, kind: input, shape index: {}]
  %s2 = inlined_call_operand.vmem [shape: bf16[128,128], index: 2, kind: input, shape index: {}]
  %s3 = inlined_call_operand.vmem [shape: bf16[128,128], index: 3, kind: input, shape index: {}]
  %s4 = inlined_call_operand.vmem [shape: bf16[64,128], index: 4, kind: input, shape index: {}]
  %s5 = inlined_call_operand.vmem [shape: bf16[128,128], index: 5, kind: input, shape index: {}]
  %s6 = inlined_call_operand.vmem [shape: f32[1,128], index: 6, kind: input, shape index: {}]
  %s7 = inlined_call_operand.vmem [shape: bf16[128,128], index: 7, kind: input, shape index: {}]
  %s8 = inlined_call_operand.vmem [shape: bf16[128,64], index: 8, kind: input, shape index: {}]
  %s9 = inlined_call_operand.vmem [shape: bf16[128,128], index: 9, kind: input, shape index: {}]
  %s10 = inlined_call_operand.vmem [shape: f32[1,128], index: 10, kind: input, shape index: {}]
  %s11 = inlined_call_operand.vmem [shape: f32[1,64], index: 11, kind: input, shape index: {}]
  %s12 = inlined_call_operand.vmem [shape: f32[1,128], index: 12, kind: input, shape index: {}]
  %s13 = inlined_call_operand.vmem [shape: f32[128,128], index: 13, kind: output, shape index: {0}]
  %s14 = inlined_call_operand.vmem [shape: f32[128,64], index: 14, kind: output, shape index: {1}]
  %s15 = inlined_call_operand.vmem [shape: f32[128,128], index: 15, kind: output, shape index: {2}]
  %16 = xla_tuple %s13, %s14, %s15
  %s17 = sld [smem:[#allocation0]]
  $region78: #{gcn_unit_forward.1} parent=0
    _
  %s19 = ssub.s32 1, %s17
  %s20 = scalar_select 0, %s19, %s17
  // Predicated region
  $region2: #{gcn_unit_forward.1} parent=0 // pred_check
    _
  $region3: #{gcn_unit_forward.1} parent=0 // pred_check_branch
    %22 = sbr.rel (0) target = $region5
  $region4: #{gcn_unit_forward.1} parent=0 // pred_region
    _
  $region5: #{gcn_unit_forward.1} parent=0 // pred_fallthru
    _
  // Predicated region
  $region6: #{gcn_unit_forward.1} parent=0 // pred_check
    _
  $region7: #{gcn_unit_forward.1} parent=0 // pred_check_branch
    %24 = sbr.rel (0) target = $region9
  $region8: #{gcn_unit_forward.1} parent=0 // pred_region
    _
  $region9: #{gcn_unit_forward.1} parent=0 // pred_fallthru
    _
  // Predicated region
  $region10: #{gcn_unit_forward.1} parent=0 // pred_check
    _
  $region11: #{gcn_unit_forward.1} parent=0 // pred_check_branch
    %26 = sbr.rel (0) target = $region13
  $region12: #{gcn_unit_forward.1} parent=0 // pred_region
    _
  $region13: #{gcn_unit_forward.1} parent=0 // pred_fallthru
    _
  // Predicated region
  $region14: #{gcn_unit_forward.1} parent=0 // pred_check
    _
  $region15: #{gcn_unit_forward.1} parent=0 // pred_check_branch
    %28 = sbr.rel (0) target = $region17
  $region16: #{gcn_unit_forward.1} parent=0 // pred_region
    _
  $region17: #{gcn_unit_forward.1} parent=0 // pred_fallthru
    _
  // Predicated region
  $region18: #{gcn_unit_forward.1} parent=0 // pred_check
    _
  $region19: #{gcn_unit_forward.1} parent=0 // pred_check_branch
    %30 = sbr.rel (0) target = $region21
  $region20: #{gcn_unit_forward.1} parent=0 // pred_region
    _
  $region21: #{gcn_unit_forward.1} parent=0 // pred_fallthru
    _
  // Predicated region
  $region22: #{gcn_unit_forward.1} parent=0 // pred_check
    _
  $region23: #{gcn_unit_forward.1} parent=0 // pred_check_branch
    %32 = sbr.rel (0) target = $region25
  $region24: #{gcn_unit_forward.1} parent=0 // pred_region
    _
  $region25: #{gcn_unit_forward.1} parent=0 // pred_fallthru
    _
  // Predicated region
  $region26: #{gcn_unit_forward.1} parent=0 // pred_check
    _
  $region27: #{gcn_unit_forward.1} parent=0 // pred_check_branch
    %34 = sbr.rel (0) target = $region29
  $region28: #{gcn_unit_forward.1} parent=0 // pred_region
    _
  $region29: #{gcn_unit_forward.1} parent=0 // pred_fallthru
    _
  // Predicated region
  $region30: #{gcn_unit_forward.1} parent=0 // pred_check
    _
  $region31: #{gcn_unit_forward.1} parent=0 // pred_check_branch
    %36 = sbr.rel (0) target = $region33
  $region32: #{gcn_unit_forward.1} parent=0 // pred_region
    _
  $region33: #{gcn_unit_forward.1} parent=0 // pred_fallthru
    _
  // Predicated region
  $region34: #{gcn_unit_forward.1} parent=0 // pred_check
    _
  $region35: #{gcn_unit_forward.1} parent=0 // pred_check_branch
    %38 = sbr.rel (0) target = $region37
  $region36: #{gcn_unit_forward.1} parent=0 // pred_region
    _
  $region37: #{gcn_unit_forward.1} parent=0 // pred_fallthru
    _
  // Predicated region
  $region38: #{gcn_unit_forward.1} parent=0 // pred_check
    _
  $region39: #{gcn_unit_forward.1} parent=0 // pred_check_branch
    %40 = sbr.rel (0) target = $region41
  $region40: #{gcn_unit_forward.1} parent=0 // pred_region
    _
  $region41: #{gcn_unit_forward.1} parent=0 // pred_fallthru
    _
  // Predicated region
  $region42: #{gcn_unit_forward.1} parent=0 // pred_check
    _
  $region43: #{gcn_unit_forward.1} parent=0 // pred_check_branch
    %42 = sbr.rel (0) target = $region45
  $region44: #{gcn_unit_forward.1} parent=0 // pred_region
    _
  $region45: #{gcn_unit_forward.1} parent=0 // pred_fallthru
    _
  // Predicated region
  $region46: #{gcn_unit_forward.1} parent=0 // pred_check
    _
  $region47: #{gcn_unit_forward.1} parent=0 // pred_check_branch
    %44 = sbr.rel (0) target = $region49
  $region48: #{gcn_unit_forward.1} parent=0 // pred_region
    _
  $region49: #{gcn_unit_forward.1} parent=0 // pred_fallthru
    _
  // Predicated region
  $region50: #{gcn_unit_forward.1} parent=0 // pred_check
    _
  $region51: #{gcn_unit_forward.1} parent=0 // pred_check_branch
    %46 = sbr.rel (0) target = $region53
  $region52: #{gcn_unit_forward.1} parent=0 // pred_region
    _
  $region53: #{gcn_unit_forward.1} parent=0 // pred_fallthru
    _
  %v48 = vld [vmem:[%s0] sm:$0xf]
  %v49 = vld [vmem:[%s0 + $0x4] sm:$0xf]
  %v50 = vld [vmem:[%s0 + $0x8] sm:$0xf]
  %v51 = vld [vmem:[%s0 + $0xc] sm:$0xf]
  %v52 = vld [vmem:[%s0 + $0x10] sm:$0xf]
  %v53 = vld [vmem:[%s0 + $0x14] sm:$0xf]
  %v54 = vld [vmem:[%s0 + $0x18] sm:$0xf]
  %v55 = vld [vmem:[%s0 + $0x1c] sm:$0xf]
  %v56 = vld [vmem:[%s0 + $0x20] sm:$0xf]
  %v57 = vld [vmem:[%s0 + $0x24] sm:$0xf]
  %v58 = vld [vmem:[%s0 + $0x28] sm:$0xf]
  %v59 = vld [vmem:[%s0 + $0x2c] sm:$0xf]
  %v60 = vld [vmem:[%s0 + $0x30] sm:$0xf]
  %v61 = vld [vmem:[%s0 + $0x34] sm:$0xf]
  %v62 = vld [vmem:[%s0 + $0x38] sm:$0xf]
  %v63 = vld [vmem:[%s0 + $0x3c] sm:$0xf]
  %v64 = vld [vmem:[%s3] sm:$0xf]
  %v65 = vld [vmem:[%s3 + $0x4] sm:$0xf]
  %v66 = vld [vmem:[%s3 + $0x8] sm:$0xf]
  %v67 = vld [vmem:[%s3 + $0xc] sm:$0xf]
  %v68 = vld [vmem:[%s3 + $0x10] sm:$0xf]
  %v69 = vld [vmem:[%s3 + $0x14] sm:$0xf]
  %v70 = vld [vmem:[%s3 + $0x18] sm:$0xf]
  %v71 = vld [vmem:[%s3 + $0x1c] sm:$0xf]
  %v72 = vld [vmem:[%s3 + $0x20] sm:$0xf]
  %v73 = vld [vmem:[%s3 + $0x24] sm:$0xf]
  %v74 = vld [vmem:[%s3 + $0x28] sm:$0xf]
  %v75 = vld [vmem:[%s3 + $0x2c] sm:$0xf]
  %v76 = vld [vmem:[%s3 + $0x30] sm:$0xf]
  %v77 = vld [vmem:[%s3 + $0x34] sm:$0xf]
  %v78 = vld [vmem:[%s3 + $0x38] sm:$0xf]
  %v79 = vld [vmem:[%s3 + $0x3c] sm:$0xf]
  %v80 = vld [vmem:[%s1] sm:$0xf]
  %v81 = vld [vmem:[%s1 + $0x4] sm:$0xf]
  %v82 = vld [vmem:[%s1 + $0x8] sm:$0xf]
  %v83 = vld [vmem:[%s1 + $0xc] sm:$0xf]
  %v84 = vld [vmem:[%s1 + $0x10] sm:$0xf]
  %v85 = vld [vmem:[%s1 + $0x14] sm:$0xf]
  %v86 = vld [vmem:[%s1 + $0x18] sm:$0xf]
  %v87 = vld [vmem:[%s1 + $0x1c] sm:$0xf]
  %v88 = vld [vmem:[%s1 + $0x20] sm:$0xf]
  %v89 = vld [vmem:[%s1 + $0x24] sm:$0xf]
  %v90 = vld [vmem:[%s1 + $0x28] sm:$0xf]
  %v91 = vld [vmem:[%s1 + $0x2c] sm:$0xf]
  %v92 = vld [vmem:[%s1 + $0x30] sm:$0xf]
  %v93 = vld [vmem:[%s1 + $0x34] sm:$0xf]
  %v94 = vld [vmem:[%s1 + $0x38] sm:$0xf]
  %v95 = vld [vmem:[%s1 + $0x3c] sm:$0xf]
  %v96 = vld [vmem:[%s4] sm:$0xf]
  %v97 = vld [vmem:[%s4 + $0x4] sm:$0xf]
  %v98 = vld [vmem:[%s4 + $0x8] sm:$0xf]
  %v99 = vld [vmem:[%s4 + $0xc] sm:$0xf]
  %v100 = vld [vmem:[%s4 + $0x10] sm:$0xf]
  %v101 = vld [vmem:[%s4 + $0x14] sm:$0xf]
  %v102 = vld [vmem:[%s4 + $0x18] sm:$0xf]
  %v103 = vld [vmem:[%s4 + $0x1c] sm:$0xf]
  %v120 = vunpack.c.l.b16 %v80
  %v121 = vunpack.c.l.b16 %v81
  %v122 = vunpack.c.l.b16 %v82
  %v123 = vunpack.c.l.b16 %v83
  %v124 = vunpack.c.l.b16 %v84
  %v125 = vunpack.c.l.b16 %v85
  %v126 = vunpack.c.l.b16 %v86
  %v127 = vunpack.c.l.b16 %v87
  %v128 = vunpack.c.l.b16 %v88
  %v129 = vunpack.c.l.b16 %v89
  %v130 = vunpack.c.l.b16 %v90
  %v131 = vunpack.c.l.b16 %v91
  %v132 = vunpack.c.l.b16 %v92
  %v133 = vunpack.c.l.b16 %v93
  %v134 = vunpack.c.l.b16 %v94
  %v135 = vunpack.c.l.b16 %v95
  %v136 = vpack.c.b16 %v121, %v120
  %v137 = vpack.c.b16 %v123, %v122
  %v138 = vpack.c.b16 %v125, %v124
  %v139 = vpack.c.b16 %v127, %v126
  %v140 = vpack.c.b16 %v129, %v128
  %v141 = vpack.c.b16 %v131, %v130
  %v142 = vpack.c.b16 %v133, %v132
  %v143 = vpack.c.b16 %v135, %v134
  %v152 = vunpack.c.l.b16 %v96
  %v153 = vunpack.c.l.b16 %v97
  %v154 = vunpack.c.l.b16 %v98
  %v155 = vunpack.c.l.b16 %v99
  %v156 = vunpack.c.l.b16 %v100
  %v157 = vunpack.c.l.b16 %v101
  %v158 = vunpack.c.l.b16 %v102
  %v159 = vunpack.c.l.b16 %v103
  %v160 = vpack.c.b16 %v153, %v152
  %v161 = vpack.c.b16 %v155, %v154
  %v162 = vpack.c.b16 %v157, %v156
  %v163 = vpack.c.b16 %v159, %v158
  %vm168 = vcmask 523264
  %v170 = vsel %vm168, %v136, 0
  %v173 = vsel %vm168, %v137, 0
  %v176 = vsel %vm168, %v138, 0
  %v179 = vsel %vm168, %v139, 0
  %v182 = vsel %vm168, %v140, 0
  %v185 = vsel %vm168, %v141, 0
  %v188 = vsel %vm168, %v142, 0
  %v191 = vsel %vm168, %v143, 0
  %193 = vmatprep.subr.bf16.mxu0 0
  %194 = vmatpush1.bf16.msra.mxu0 %v160
  %195 = vmatprep.subr.bf16.mxu0 0
  %196 = vmatpush1.bf16.msra.mxu0 %v161
  %197 = vmatprep.subr.bf16.mxu0 0
  %198 = vmatpush1.bf16.msra.mxu0 %v162
  %199 = vmatprep.subr.bf16.mxu0 0
  %200 = vmatpush1.bf16.msra.mxu0 %v163
  %201 = vmatprep.subr.bf16.mxu0 0
  %202 = vmatpush1.bf16.msra.mxu0 0
  %203 = vmatprep.subr.bf16.mxu0 0
  %204 = vmatpush1.bf16.msra.mxu0 0
  %205 = vmatprep.subr.bf16.mxu0 0
  %206 = vmatpush1.bf16.msra.mxu0 0
  %207 = vmatprep.subr.bf16.mxu0 0
  %208 = vmatpush1.bf16.msra.mxu0 0
  %209 = vmatprep.subr.bf16.mxu0 0
  %210 = vmatpush1.bf16.msra.mxu0 0
  %211 = vmatprep.subr.bf16.mxu0 0
  %212 = vmatpush1.bf16.msra.mxu0 0
  %213 = vmatprep.subr.bf16.mxu0 0
  %214 = vmatpush1.bf16.msra.mxu0 0
  %215 = vmatprep.subr.bf16.mxu0 0
  %216 = vmatpush1.bf16.msra.mxu0 0
  %217 = vmatprep.subr.bf16.mxu0 0
  %218 = vmatpush1.bf16.msra.mxu0 0
  %219 = vmatprep.subr.bf16.mxu0 0
  %220 = vmatpush1.bf16.msra.mxu0 0
  %221 = vmatprep.subr.bf16.mxu0 0
  %222 = vmatpush1.bf16.msra.mxu0 0
  %223 = vmatprep.subr.bf16.mxu0 0
  %224 = vmatpush1.bf16.msra.mxu0 0
  %225 = vmatprep.mubr.bf16.mxu0 0
  %226 = vmatmul.mubr.bf16.gmra.mrb[0].mxu0 %v170
  %v227 = vpop.f32.mrb[0].mxu0
  %v228 = vadd.f32 0.0, %v227
  %v229 = vpop.f32.mrb[0].mxu0
  %v230 = vpop.f32.mrb[0].mxu0
  %v231 = vadd.f32 0.0, %v230
  %v232 = vpop.f32.mrb[0].mxu0
  %233 = vmatprep.mubr.bf16.mxu0 0
  %234 = vmatmul.mubr.bf16.gmra.mrb[0].mxu0 %v173
  %v235 = vpop.f32.mrb[0].mxu0
  %v236 = vadd.f32 0.0, %v235
  %v237 = vpop.f32.mrb[0].mxu0
  %v238 = vpop.f32.mrb[0].mxu0
  %v239 = vadd.f32 0.0, %v238
  %v240 = vpop.f32.mrb[0].mxu0
  %241 = vmatprep.mubr.bf16.mxu0 0
  %242 = vmatmul.mubr.bf16.gmra.mrb[0].mxu0 %v176
  %v243 = vpop.f32.mrb[0].mxu0
  %v244 = vadd.f32 0.0, %v243
  %v245 = vpop.f32.mrb[0].mxu0
  %v246 = vpop.f32.mrb[0].mxu0
  %v247 = vadd.f32 0.0, %v246
  %v248 = vpop.f32.mrb[0].mxu0
  %249 = vmatprep.mubr.bf16.mxu0 0
  %250 = vmatmul.mubr.bf16.gmra.mrb[0].mxu0 %v179
  %v251 = vpop.f32.mrb[0].mxu0
  %v252 = vadd.f32 0.0, %v251
  %v253 = vpop.f32.mrb[0].mxu0
  %v254 = vpop.f32.mrb[0].mxu0
  %v255 = vadd.f32 0.0, %v254
  %v256 = vpop.f32.mrb[0].mxu0
  %257 = vmatprep.mubr.bf16.mxu0 0
  %258 = vmatmul.mubr.bf16.gmra.mrb[0].mxu0 %v182
  %v259 = vpop.f32.mrb[0].mxu0
  %v260 = vadd.f32 0.0, %v259
  %v261 = vpop.f32.mrb[0].mxu0
  %v262 = vpop.f32.mrb[0].mxu0
  %v263 = vadd.f32 0.0, %v262
  %v264 = vpop.f32.mrb[0].mxu0
  %265 = vmatprep.mubr.bf16.mxu0 0
  %266 = vmatmul.mubr.bf16.gmra.mrb[0].mxu0 %v185
  %v267 = vpop.f32.mrb[0].mxu0
  %v268 = vadd.f32 0.0, %v267
  %v269 = vpop.f32.mrb[0].mxu0
  %v270 = vpop.f32.mrb[0].mxu0
  %v271 = vadd.f32 0.0, %v270
  %v272 = vpop.f32.mrb[0].mxu0
  %273 = vmatprep.mubr.bf16.mxu0 0
  %274 = vmatmul.mubr.bf16.gmra.mrb[0].mxu0 %v188
  %v275 = vpop.f32.mrb[0].mxu0
  %v276 = vadd.f32 0.0, %v275
  %v277 = vpop.f32.mrb[0].mxu0
  %v278 = vpop.f32.mrb[0].mxu0
  %v279 = vadd.f32 0.0, %v278
  %v280 = vpop.f32.mrb[0].mxu0
  %281 = vmatprep.mubr.bf16.mxu0 0
  %282 = vmatmul.mubr.bf16.gmra.mrb[0].mxu0 %v191
  %v283 = vpop.f32.mrb[0].mxu0
  %v284 = vadd.f32 0.0, %v283
  %v285 = vpop.f32.mrb[0].mxu0
  %v286 = vpop.f32.mrb[0].mxu0
  %v287 = vadd.f32 0.0, %v286
  %v288 = vpop.f32.mrb[0].mxu0
  %289 = vdwg.mxu0
  %v306 = vunpack.c.l.b16 %v48
  %v307 = vunpack.c.l.b16 %v49
  %v308 = vunpack.c.l.b16 %v50
  %v309 = vunpack.c.l.b16 %v51
  %v310 = vunpack.c.l.b16 %v52
  %v311 = vunpack.c.l.b16 %v53
  %v312 = vunpack.c.l.b16 %v54
  %v313 = vunpack.c.l.b16 %v55
  %v314 = vunpack.c.l.b16 %v56
  %v315 = vunpack.c.l.b16 %v57
  %v316 = vunpack.c.l.b16 %v58
  %v317 = vunpack.c.l.b16 %v59
  %v318 = vunpack.c.l.b16 %v60
  %v319 = vunpack.c.l.b16 %v61
  %v320 = vunpack.c.l.b16 %v62
  %v321 = vunpack.c.l.b16 %v63
  %v322 = vpack.c.b16 %v307, %v306
  %v323 = vpack.c.b16 %v309, %v308
  %v324 = vpack.c.b16 %v311, %v310
  %v325 = vpack.c.b16 %v313, %v312
  %v326 = vpack.c.b16 %v315, %v314
  %v327 = vpack.c.b16 %v317, %v316
  %v328 = vpack.c.b16 %v319, %v318
  %v329 = vpack.c.b16 %v321, %v320
  %v354 = vunpack.c.l.b16 %v64
  %v355 = vunpack.c.l.b16 %v65
  %v356 = vunpack.c.l.b16 %v66
  %v357 = vunpack.c.l.b16 %v67
  %v358 = vunpack.c.l.b16 %v68
  %v359 = vunpack.c.l.b16 %v69
  %v360 = vunpack.c.l.b16 %v70
  %v361 = vunpack.c.l.b16 %v71
  %v362 = vunpack.c.l.b16 %v72
  %v363 = vunpack.c.l.b16 %v73
  %v364 = vunpack.c.l.b16 %v74
  %v365 = vunpack.c.l.b16 %v75
  %v366 = vunpack.c.l.b16 %v76
  %v367 = vunpack.c.l.b16 %v77
  %v368 = vunpack.c.l.b16 %v78
  %v369 = vunpack.c.l.b16 %v79
  %v370 = vpack.c.b16 %v355, %v354
  %v371 = vpack.c.b16 %v357, %v356
  %v372 = vpack.c.b16 %v359, %v358
  %v373 = vpack.c.b16 %v361, %v360
  %v374 = vpack.c.b16 %v363, %v362
  %v375 = vpack.c.b16 %v365, %v364
  %v376 = vpack.c.b16 %v367, %v366
  %v377 = vpack.c.b16 %v369, %v368
  %386 = vmatprep.subr.bf16.mxu0 0
  %387 = vmatpush1.bf16.msra.mxu0 %v370
  %388 = vmatprep.subr.bf16.mxu0 0
  %389 = vmatpush1.bf16.msra.mxu0 %v371
  %390 = vmatprep.subr.bf16.mxu0 0
  %391 = vmatpush1.bf16.msra.mxu0 %v372
  %392 = vmatprep.subr.bf16.mxu0 0
  %393 = vmatpush1.bf16.msra.mxu0 %v373
  %394 = vmatprep.subr.bf16.mxu0 0
  %395 = vmatpush1.bf16.msra.mxu0 %v374
  %396 = vmatprep.subr.bf16.mxu0 0
  %397 = vmatpush1.bf16.msra.mxu0 %v375
  %398 = vmatprep.subr.bf16.mxu0 0
  %399 = vmatpush1.bf16.msra.mxu0 %v376
  %400 = vmatprep.subr.bf16.mxu0 0
  %401 = vmatpush1.bf16.msra.mxu0 %v377
  %402 = vmatprep.subr.bf16.mxu0 0
  %403 = vmatpush1.bf16.msra.mxu0 0
  %404 = vmatprep.subr.bf16.mxu0 0
  %405 = vmatpush1.bf16.msra.mxu0 0
  %406 = vmatprep.subr.bf16.mxu0 0
  %407 = vmatpush1.bf16.msra.mxu0 0
  %408 = vmatprep.subr.bf16.mxu0 0
  %409 = vmatpush1.bf16.msra.mxu0 0
  %410 = vmatprep.subr.bf16.mxu0 0
  %411 = vmatpush1.bf16.msra.mxu0 0
  %412 = vmatprep.subr.bf16.mxu0 0
  %413 = vmatpush1.bf16.msra.mxu0 0
  %414 = vmatprep.subr.bf16.mxu0 0
  %415 = vmatpush1.bf16.msra.mxu0 0
  %416 = vmatprep.subr.bf16.mxu0 0
  %417 = vmatpush1.bf16.msra.mxu0 0
  %418 = vmatprep.mubr.bf16.mxu0 0
  %419 = vmatmul.mubr.bf16.gmra.mrb[0].mxu0 %v322
  %v420 = vpop.f32.mrb[0].mxu0
  %v421 = vadd.f32 %v228, %v420
  %v422 = vpop.f32.mrb[0].mxu0
  %v423 = vpop.f32.mrb[0].mxu0
  %v424 = vadd.f32 %v231, %v423
  %v425 = vpop.f32.mrb[0].mxu0
  %426 = vmatprep.mubr.bf16.mxu0 0
  %427 = vmatmul.mubr.bf16.gmra.mrb[0].mxu0 %v323
  %v428 = vpop.f32.mrb[0].mxu0
  %v429 = vadd.f32 %v236, %v428
  %v430 = vpop.f32.mrb[0].mxu0
  %v431 = vpop.f32.mrb[0].mxu0
  %v432 = vadd.f32 %v239, %v431
  %v433 = vpop.f32.mrb[0].mxu0
  %434 = vmatprep.mubr.bf16.mxu0 0
  %435 = vmatmul.mubr.bf16.gmra.mrb[0].mxu0 %v324
  %v436 = vpop.f32.mrb[0].mxu0
  %v437 = vadd.f32 %v244, %v436
  %v438 = vpop.f32.mrb[0].mxu0
  %v439 = vpop.f32.mrb[0].mxu0
  %v440 = vadd.f32 %v247, %v439
  %v441 = vpop.f32.mrb[0].mxu0
  %442 = vmatprep.mubr.bf16.mxu0 0
  %443 = vmatmul.mubr.bf16.gmra.mrb[0].mxu0 %v325
  %v444 = vpop.f32.mrb[0].mxu0
  %v445 = vadd.f32 %v252, %v444
  %v446 = vpop.f32.mrb[0].mxu0
  %v447 = vpop.f32.mrb[0].mxu0
  %v448 = vadd.f32 %v255, %v447
  %v449 = vpop.f32.mrb[0].mxu0
  %450 = vmatprep.mubr.bf16.mxu0 0
  %451 = vmatmul.mubr.bf16.gmra.mrb[0].mxu0 %v326
  %v452 = vpop.f32.mrb[0].mxu0
  %v453 = vadd.f32 %v260, %v452
  %v454 = vpop.f32.mrb[0].mxu0
  %v455 = vpop.f32.mrb[0].mxu0
  %v456 = vadd.f32 %v263, %v455
  %v457 = vpop.f32.mrb[0].mxu0
  %458 = vmatprep.mubr.bf16.mxu0 0
  %459 = vmatmul.mubr.bf16.gmra.mrb[0].mxu0 %v327
  %v460 = vpop.f32.mrb[0].mxu0
  %v461 = vadd.f32 %v268, %v460
  %v462 = vpop.f32.mrb[0].mxu0
  %v463 = vpop.f32.mrb[0].mxu0
  %v464 = vadd.f32 %v271, %v463
  %v465 = vpop.f32.mrb[0].mxu0
  %466 = vmatprep.mubr.bf16.mxu0 0
  %467 = vmatmul.mubr.bf16.gmra.mrb[0].mxu0 %v328
  %v468 = vpop.f32.mrb[0].mxu0
  %v469 = vadd.f32 %v276, %v468
  %v470 = vpop.f32.mrb[0].mxu0
  %v471 = vpop.f32.mrb[0].mxu0
  %v472 = vadd.f32 %v279, %v471
  %v473 = vpop.f32.mrb[0].mxu0
  %474 = vmatprep.mubr.bf16.mxu0 0
  %475 = vmatmul.mubr.bf16.gmra.mrb[0].mxu0 %v329
  %v476 = vpop.f32.mrb[0].mxu0
  %v477 = vadd.f32 %v284, %v476
  %v478 = vpop.f32.mrb[0].mxu0
  %v479 = vpop.f32.mrb[0].mxu0
  %v480 = vadd.f32 %v287, %v479
  %v481 = vpop.f32.mrb[0].mxu0
  %482 = vdwg.mxu0
  %v483 = vld [vmem:[%s2] sm:$0xf]
  %v484 = vld [vmem:[%s2 + $0x4] sm:$0xf]
  %v485 = vld [vmem:[%s2 + $0x8] sm:$0xf]
  %v486 = vld [vmem:[%s2 + $0xc] sm:$0xf]
  %v487 = vld [vmem:[%s2 + $0x10] sm:$0xf]
  %v488 = vld [vmem:[%s2 + $0x14] sm:$0xf]
  %v489 = vld [vmem:[%s2 + $0x18] sm:$0xf]
  %v490 = vld [vmem:[%s2 + $0x1c] sm:$0xf]
  %v491 = vld [vmem:[%s2 + $0x20] sm:$0xf]
  %v492 = vld [vmem:[%s2 + $0x24] sm:$0xf]
  %v493 = vld [vmem:[%s2 + $0x28] sm:$0xf]
  %v494 = vld [vmem:[%s2 + $0x2c] sm:$0xf]
  %v495 = vld [vmem:[%s2 + $0x30] sm:$0xf]
  %v496 = vld [vmem:[%s2 + $0x34] sm:$0xf]
  %v497 = vld [vmem:[%s2 + $0x38] sm:$0xf]
  %v498 = vld [vmem:[%s2 + $0x3c] sm:$0xf]
  %v499 = vld [vmem:[%s5] sm:$0xf]
  %v500 = vld [vmem:[%s5 + $0x4] sm:$0xf]
  %v501 = vld [vmem:[%s5 + $0x8] sm:$0xf]
  %v502 = vld [vmem:[%s5 + $0xc] sm:$0xf]
  %v503 = vld [vmem:[%s5 + $0x10] sm:$0xf]
  %v504 = vld [vmem:[%s5 + $0x14] sm:$0xf]
  %v505 = vld [vmem:[%s5 + $0x18] sm:$0xf]
  %v506 = vld [vmem:[%s5 + $0x1c] sm:$0xf]
  %v507 = vld [vmem:[%s5 + $0x20] sm:$0xf]
  %v508 = vld [vmem:[%s5 + $0x24] sm:$0xf]
  %v509 = vld [vmem:[%s5 + $0x28] sm:$0xf]
  %v510 = vld [vmem:[%s5 + $0x2c] sm:$0xf]
  %v511 = vld [vmem:[%s5 + $0x30] sm:$0xf]
  %v512 = vld [vmem:[%s5 + $0x34] sm:$0xf]
  %v513 = vld [vmem:[%s5 + $0x38] sm:$0xf]
  %v514 = vld [vmem:[%s5 + $0x3c] sm:$0xf]
  %v531 = vunpack.c.l.b16 %v483
  %v532 = vunpack.c.l.b16 %v484
  %v533 = vunpack.c.l.b16 %v485
  %v534 = vunpack.c.l.b16 %v486
  %v535 = vunpack.c.l.b16 %v487
  %v536 = vunpack.c.l.b16 %v488
  %v537 = vunpack.c.l.b16 %v489
  %v538 = vunpack.c.l.b16 %v490
  %v539 = vunpack.c.l.b16 %v491
  %v540 = vunpack.c.l.b16 %v492
  %v541 = vunpack.c.l.b16 %v493
  %v542 = vunpack.c.l.b16 %v494
  %v543 = vunpack.c.l.b16 %v495
  %v544 = vunpack.c.l.b16 %v496
  %v545 = vunpack.c.l.b16 %v497
  %v546 = vunpack.c.l.b16 %v498
  %v547 = vpack.c.b16 %v532, %v531
  %v548 = vpack.c.b16 %v534, %v533
  %v549 = vpack.c.b16 %v536, %v535
  %v550 = vpack.c.b16 %v538, %v537
  %v551 = vpack.c.b16 %v540, %v539
  %v552 = vpack.c.b16 %v542, %v541
  %v553 = vpack.c.b16 %v544, %v543
  %v554 = vpack.c.b16 %v546, %v545
  %v579 = vunpack.c.l.b16 %v499
  %v580 = vunpack.c.l.b16 %v500
  %v581 = vunpack.c.l.b16 %v501
  %v582 = vunpack.c.l.b16 %v502
  %v583 = vunpack.c.l.b16 %v503
  %v584 = vunpack.c.l.b16 %v504
  %v585 = vunpack.c.l.b16 %v505
  %v586 = vunpack.c.l.b16 %v506
  %v587 = vunpack.c.l.b16 %v507
  %v588 = vunpack.c.l.b16 %v508
  %v589 = vunpack.c.l.b16 %v509
  %v590 = vunpack.c.l.b16 %v510
  %v591 = vunpack.c.l.b16 %v511
  %v592 = vunpack.c.l.b16 %v512
  %v593 = vunpack.c.l.b16 %v513
  %v594 = vunpack.c.l.b16 %v514
  %v595 = vpack.c.b16 %v580, %v579
  %v596 = vpack.c.b16 %v582, %v581
  %v597 = vpack.c.b16 %v584, %v583
  %v598 = vpack.c.b16 %v586, %v585
  %v599 = vpack.c.b16 %v588, %v587
  %v600 = vpack.c.b16 %v590, %v589
  %v601 = vpack.c.b16 %v592, %v591
  %v602 = vpack.c.b16 %v594, %v593
  %611 = vmatprep.subr.bf16.mxu0 0
  %612 = vmatpush1.bf16.msra.mxu0 %v595
  %613 = vmatprep.subr.bf16.mxu0 0
  %614 = vmatpush1.bf16.msra.mxu0 %v596
  %615 = vmatprep.subr.bf16.mxu0 0
  %616 = vmatpush1.bf16.msra.mxu0 %v597
  %617 = vmatprep.subr.bf16.mxu0 0
  %618 = vmatpush1.bf16.msra.mxu0 %v598
  %619 = vmatprep.subr.bf16.mxu0 0
  %620 = vmatpush1.bf16.msra.mxu0 %v599
  %621 = vmatprep.subr.bf16.mxu0 0
  %622 = vmatpush1.bf16.msra.mxu0 %v600
  %623 = vmatprep.subr.bf16.mxu0 0
  %624 = vmatpush1.bf16.msra.mxu0 %v601
  %625 = vmatprep.subr.bf16.mxu0 0
  %626 = vmatpush1.bf16.msra.mxu0 %v602
  %627 = vmatprep.subr.bf16.mxu0 0
  %628 = vmatpush1.bf16.msra.mxu0 0
  %629 = vmatprep.subr.bf16.mxu0 0
  %630 = vmatpush1.bf16.msra.mxu0 0
  %631 = vmatprep.subr.bf16.mxu0 0
  %632 = vmatpush1.bf16.msra.mxu0 0
  %633 = vmatprep.subr.bf16.mxu0 0
  %634 = vmatpush1.bf16.msra.mxu0 0
  %635 = vmatprep.subr.bf16.mxu0 0
  %636 = vmatpush1.bf16.msra.mxu0 0
  %637 = vmatprep.subr.bf16.mxu0 0
  %638 = vmatpush1.bf16.msra.mxu0 0
  %639 = vmatprep.subr.bf16.mxu0 0
  %640 = vmatpush1.bf16.msra.mxu0 0
  %641 = vmatprep.subr.bf16.mxu0 0
  %642 = vmatpush1.bf16.msra.mxu0 0
  %643 = vmatprep.mubr.bf16.mxu0 0
  %644 = vmatmul.mubr.bf16.gmra.mrb[0].mxu0 %v547
  %v645 = vpop.f32.mrb[0].mxu0
  %v646 = vadd.f32 0.0, %v645
  %v647 = vpop.f32.mrb[0].mxu0
  %v648 = vpop.f32.mrb[0].mxu0
  %v649 = vadd.f32 0.0, %v648
  %v650 = vpop.f32.mrb[0].mxu0
  %651 = vmatprep.mubr.bf16.mxu0 0
  %652 = vmatmul.mubr.bf16.gmra.mrb[0].mxu0 %v548
  %v653 = vpop.f32.mrb[0].mxu0
  %v654 = vadd.f32 0.0, %v653
  %v655 = vpop.f32.mrb[0].mxu0
  %v656 = vpop.f32.mrb[0].mxu0
  %v657 = vadd.f32 0.0, %v656
  %v658 = vpop.f32.mrb[0].mxu0
  %659 = vmatprep.mubr.bf16.mxu0 0
  %660 = vmatmul.mubr.bf16.gmra.mrb[0].mxu0 %v549
  %v661 = vpop.f32.mrb[0].mxu0
  %v662 = vadd.f32 0.0, %v661
  %v663 = vpop.f32.mrb[0].mxu0
  %v664 = vpop.f32.mrb[0].mxu0
  %v665 = vadd.f32 0.0, %v664
  %v666 = vpop.f32.mrb[0].mxu0
  %667 = vmatprep.mubr.bf16.mxu0 0
  %668 = vmatmul.mubr.bf16.gmra.mrb[0].mxu0 %v550
  %v669 = vpop.f32.mrb[0].mxu0
  %v670 = vadd.f32 0.0, %v669
  %v671 = vpop.f32.mrb[0].mxu0
  %v672 = vpop.f32.mrb[0].mxu0
  %v673 = vadd.f32 0.0, %v672
  %v674 = vpop.f32.mrb[0].mxu0
  %675 = vmatprep.mubr.bf16.mxu0 0
  %676 = vmatmul.mubr.bf16.gmra.mrb[0].mxu0 %v551
  %v677 = vpop.f32.mrb[0].mxu0
  %v678 = vadd.f32 0.0, %v677
  %v679 = vpop.f32.mrb[0].mxu0
  %v680 = vpop.f32.mrb[0].mxu0
  %v681 = vadd.f32 0.0, %v680
  %v682 = vpop.f32.mrb[0].mxu0
  %683 = vmatprep.mubr.bf16.mxu0 0
  %684 = vmatmul.mubr.bf16.gmra.mrb[0].mxu0 %v552
  %v685 = vpop.f32.mrb[0].mxu0
  %v686 = vadd.f32 0.0, %v685
  %v687 = vpop.f32.mrb[0].mxu0
  %v688 = vpop.f32.mrb[0].mxu0
  %v689 = vadd.f32 0.0, %v688
  %v690 = vpop.f32.mrb[0].mxu0
  %691 = vmatprep.mubr.bf16.mxu0 0
  %692 = vmatmul.mubr.bf16.gmra.mrb[0].mxu0 %v553
  %v693 = vpop.f32.mrb[0].mxu0
  %v694 = vadd.f32 0.0, %v693
  %v695 = vpop.f32.mrb[0].mxu0
  %v696 = vpop.f32.mrb[0].mxu0
  %v697 = vadd.f32 0.0, %v696
  %v698 = vpop.f32.mrb[0].mxu0
  %699 = vmatprep.mubr.bf16.mxu0 0
  %700 = vmatmul.mubr.bf16.gmra.mrb[0].mxu0 %v554
  %v701 = vpop.f32.mrb[0].mxu0
  %v702 = vadd.f32 0.0, %v701
  %v703 = vpop.f32.mrb[0].mxu0
  %v704 = vpop.f32.mrb[0].mxu0
  %v705 = vadd.f32 0.0, %v704
  %v706 = vpop.f32.mrb[0].mxu0
  %707 = vdwg.mxu0
  %v708 = vadd.f32 %v421, %v646
  %v709 = vadd.f32 %v424, %v649
  %v710 = vadd.f32 %v429, %v654
  %v711 = vadd.f32 %v432, %v657
  %v712 = vadd.f32 %v437, %v662
  %v713 = vadd.f32 %v440, %v665
  %v714 = vadd.f32 %v445, %v670
  %v715 = vadd.f32 %v448, %v673
  %v716 = vadd.f32 %v453, %v678
  %v717 = vadd.f32 %v456, %v681
  %v718 = vadd.f32 %v461, %v686
  %v719 = vadd.f32 %v464, %v689
  %v720 = vadd.f32 %v469, %v694
  %v721 = vadd.f32 %v472, %v697
  %v722 = vadd.f32 %v477, %v702
  %v723 = vadd.f32 %v480, %v705
  %v724 = vld [vmem:[%s6] sm:$0x1]
  %v726 = vlaneseq
  %v727 = vshrl.u32 %v726, 7
  %v728 = vsub.s32 0, %v727
  %v729 = vrot.slane %v724, %v728
  %v731 = vadd.f32 %v708, %v729
  %v732 = vadd.f32 %v709, %v729
  %v733 = vadd.f32 %v710, %v729
  %v734 = vadd.f32 %v711, %v729
  %v735 = vadd.f32 %v712, %v729
  %v736 = vadd.f32 %v713, %v729
  %v737 = vadd.f32 %v714, %v729
  %v738 = vadd.f32 %v715, %v729
  %v739 = vadd.f32 %v716, %v729
  %v740 = vadd.f32 %v717, %v729
  %v741 = vadd.f32 %v718, %v729
  %v742 = vadd.f32 %v719, %v729
  %v743 = vadd.f32 %v720, %v729
  %v744 = vadd.f32 %v721, %v729
  %v745 = vadd.f32 %v722, %v729
  %v746 = vadd.f32 %v723, %v729
  %v747 = vmax.f32 %v731, 0.0
  %v748 = vmax.f32 %v732, 0.0
  %v749 = vmax.f32 %v733, 0.0
  %v750 = vmax.f32 %v734, 0.0
  %v751 = vmax.f32 %v735, 0.0
  %v752 = vmax.f32 %v736, 0.0
  %v753 = vmax.f32 %v737, 0.0
  %v754 = vmax.f32 %v738, 0.0
  %v755 = vmax.f32 %v739, 0.0
  %v756 = vmax.f32 %v740, 0.0
  %v757 = vmax.f32 %v741, 0.0
  %v758 = vmax.f32 %v742, 0.0
  %v759 = vmax.f32 %v743, 0.0
  %v760 = vmax.f32 %v744, 0.0
  %v761 = vmax.f32 %v745, 0.0
  %v762 = vmax.f32 %v746, 0.0
  %v763 = vpack.c.bf16 %v748, %v747
  %v764 = vpack.c.bf16 %v750, %v749
  %v765 = vpack.c.bf16 %v752, %v751
  %v766 = vpack.c.bf16 %v754, %v753
  %v767 = vpack.c.bf16 %v756, %v755
  %v768 = vpack.c.bf16 %v758, %v757
  %v769 = vpack.c.bf16 %v760, %v759
  %v770 = vpack.c.bf16 %v762, %v761
  %v771 = vld [vmem:[%s7] sm:$0xf]
  %v772 = vld [vmem:[%s7 + $0x4] sm:$0xf]
  %v773 = vld [vmem:[%s7 + $0x8] sm:$0xf]
  %v774 = vld [vmem:[%s7 + $0xc] sm:$0xf]
  %v775 = vld [vmem:[%s7 + $0x10] sm:$0xf]
  %v776 = vld [vmem:[%s7 + $0x14] sm:$0xf]
  %v777 = vld [vmem:[%s7 + $0x18] sm:$0xf]
  %v778 = vld [vmem:[%s7 + $0x1c] sm:$0xf]
  %v779 = vld [vmem:[%s7 + $0x20] sm:$0xf]
  %v780 = vld [vmem:[%s7 + $0x24] sm:$0xf]
  %v781 = vld [vmem:[%s7 + $0x28] sm:$0xf]
  %v782 = vld [vmem:[%s7 + $0x2c] sm:$0xf]
  %v783 = vld [vmem:[%s7 + $0x30] sm:$0xf]
  %v784 = vld [vmem:[%s7 + $0x34] sm:$0xf]
  %v785 = vld [vmem:[%s7 + $0x38] sm:$0xf]
  %v786 = vld [vmem:[%s7 + $0x3c] sm:$0xf]
  %v787 = vld [vmem:[%s10] sm:$0x1]
  %v789 = vlaneseq
  %v790 = vshrl.u32 %v789, 7
  %v791 = vsub.s32 0, %v790
  %v792 = vrot.slane %v787, %v791
  %v810 = vunpack.c.l.b16 %v771
  %v811 = vunpack.c.l.b16 %v772
  %v812 = vunpack.c.l.b16 %v773
  %v813 = vunpack.c.l.b16 %v774
  %v814 = vunpack.c.l.b16 %v775
  %v815 = vunpack.c.l.b16 %v776
  %v816 = vunpack.c.l.b16 %v777
  %v817 = vunpack.c.l.b16 %v778
  %v818 = vunpack.c.l.b16 %v779
  %v819 = vunpack.c.l.b16 %v780
  %v820 = vunpack.c.l.b16 %v781
  %v821 = vunpack.c.l.b16 %v782
  %v822 = vunpack.c.l.b16 %v783
  %v823 = vunpack.c.l.b16 %v784
  %v824 = vunpack.c.l.b16 %v785
  %v825 = vunpack.c.l.b16 %v786
  %v826 = vpack.c.b16 %v811, %v810
  %v827 = vpack.c.b16 %v813, %v812
  %v828 = vpack.c.b16 %v815, %v814
  %v829 = vpack.c.b16 %v817, %v816
  %v830 = vpack.c.b16 %v819, %v818
  %v831 = vpack.c.b16 %v821, %v820
  %v832 = vpack.c.b16 %v823, %v822
  %v833 = vpack.c.b16 %v825, %v824
  %842 = vmatprep.subr.bf16.mxu0 0
  %843 = vmatpush1.bf16.msra.mxu0 %v826
  %844 = vmatprep.subr.bf16.mxu0 0
  %845 = vmatpush1.bf16.msra.mxu0 %v827
  %846 = vmatprep.subr.bf16.mxu0 0
  %847 = vmatpush1.bf16.msra.mxu0 %v828
  %848 = vmatprep.subr.bf16.mxu0 0
  %849 = vmatpush1.bf16.msra.mxu0 %v829
  %850 = vmatprep.subr.bf16.mxu0 0
  %851 = vmatpush1.bf16.msra.mxu0 %v830
  %852 = vmatprep.subr.bf16.mxu0 0
  %853 = vmatpush1.bf16.msra.mxu0 %v831
  %854 = vmatprep.subr.bf16.mxu0 0
  %855 = vmatpush1.bf16.msra.mxu0 %v832
  %856 = vmatprep.subr.bf16.mxu0 0
  %857 = vmatpush1.bf16.msra.mxu0 %v833
  %858 = vmatprep.subr.bf16.mxu0 0
  %859 = vmatpush1.bf16.msra.mxu0 0
  %860 = vmatprep.subr.bf16.mxu0 0
  %861 = vmatpush1.bf16.msra.mxu0 0
  %862 = vmatprep.subr.bf16.mxu0 0
  %863 = vmatpush1.bf16.msra.mxu0 0
  %864 = vmatprep.subr.bf16.mxu0 0
  %865 = vmatpush1.bf16.msra.mxu0 0
  %866 = vmatprep.subr.bf16.mxu0 0
  %867 = vmatpush1.bf16.msra.mxu0 0
  %868 = vmatprep.subr.bf16.mxu0 0
  %869 = vmatpush1.bf16.msra.mxu0 0
  %870 = vmatprep.subr.bf16.mxu0 0
  %871 = vmatpush1.bf16.msra.mxu0 0
  %872 = vmatprep.subr.bf16.mxu0 0
  %873 = vmatpush1.bf16.msra.mxu0 0
  %874 = vmatprep.mubr.bf16.mxu0 0
  %875 = vmatmul.mubr.bf16.gmra.mrb[0].mxu0 %v763
  %v876 = vpop.f32.mrb[0].mxu0
  %v877 = vadd.f32 %v792, %v876
  %v878 = vpop.f32.mrb[0].mxu0
  %v879 = vpop.f32.mrb[0].mxu0
  %v880 = vadd.f32 %v792, %v879
  %v881 = vpop.f32.mrb[0].mxu0
  %882 = vmatprep.mubr.bf16.mxu0 0
  %883 = vmatmul.mubr.bf16.gmra.mrb[0].mxu0 %v764
  %v884 = vpop.f32.mrb[0].mxu0
  %v885 = vadd.f32 %v792, %v884
  %v886 = vpop.f32.mrb[0].mxu0
  %v887 = vpop.f32.mrb[0].mxu0
  %v888 = vadd.f32 %v792, %v887
  %v889 = vpop.f32.mrb[0].mxu0
  %890 = vmatprep.mubr.bf16.mxu0 0
  %891 = vmatmul.mubr.bf16.gmra.mrb[0].mxu0 %v765
  %v892 = vpop.f32.mrb[0].mxu0
  %v893 = vadd.f32 %v792, %v892
  %v894 = vpop.f32.mrb[0].mxu0
  %v895 = vpop.f32.mrb[0].mxu0
  %v896 = vadd.f32 %v792, %v895
  %v897 = vpop.f32.mrb[0].mxu0
  %898 = vmatprep.mubr.bf16.mxu0 0
  %899 = vmatmul.mubr.bf16.gmra.mrb[0].mxu0 %v766
  %v900 = vpop.f32.mrb[0].mxu0
  %v901 = vadd.f32 %v792, %v900
  %v902 = vpop.f32.mrb[0].mxu0
  %v903 = vpop.f32.mrb[0].mxu0
  %v904 = vadd.f32 %v792, %v903
  %v905 = vpop.f32.mrb[0].mxu0
  %906 = vmatprep.mubr.bf16.mxu0 0
  %907 = vmatmul.mubr.bf16.gmra.mrb[0].mxu0 %v767
  %v908 = vpop.f32.mrb[0].mxu0
  %v909 = vadd.f32 %v792, %v908
  %v910 = vpop.f32.mrb[0].mxu0
  %v911 = vpop.f32.mrb[0].mxu0
  %v912 = vadd.f32 %v792, %v911
  %v913 = vpop.f32.mrb[0].mxu0
  %914 = vmatprep.mubr.bf16.mxu0 0
  %915 = vmatmul.mubr.bf16.gmra.mrb[0].mxu0 %v768
  %v916 = vpop.f32.mrb[0].mxu0
  %v917 = vadd.f32 %v792, %v916
  %v918 = vpop.f32.mrb[0].mxu0
  %v919 = vpop.f32.mrb[0].mxu0
  %v920 = vadd.f32 %v792, %v919
  %v921 = vpop.f32.mrb[0].mxu0
  %922 = vmatprep.mubr.bf16.mxu0 0
  %923 = vmatmul.mubr.bf16.gmra.mrb[0].mxu0 %v769
  %v924 = vpop.f32.mrb[0].mxu0
  %v925 = vadd.f32 %v792, %v924
  %v926 = vpop.f32.mrb[0].mxu0
  %v927 = vpop.f32.mrb[0].mxu0
  %v928 = vadd.f32 %v792, %v927
  %v929 = vpop.f32.mrb[0].mxu0
  %930 = vmatprep.mubr.bf16.mxu0 0
  %931 = vmatmul.mubr.bf16.gmra.mrb[0].mxu0 %v770
  %v932 = vpop.f32.mrb[0].mxu0
  %v933 = vadd.f32 %v792, %v932
  %v934 = vpop.f32.mrb[0].mxu0
  %v935 = vpop.f32.mrb[0].mxu0
  %v936 = vadd.f32 %v792, %v935
  %v937 = vpop.f32.mrb[0].mxu0
  %938 = vdwg.mxu0
  %939 = vst [vmem:[%s13] sm:$0xff] %v877
  %940 = vst [vmem:[%s13 + $0x8] sm:$0xff] %v880
  %941 = vst [vmem:[%s13 + $0x10] sm:$0xff] %v885
  %942 = vst [vmem:[%s13 + $0x18] sm:$0xff] %v888
  %943 = vst [vmem:[%s13 + $0x20] sm:$0xff] %v893
  %944 = vst [vmem:[%s13 + $0x28] sm:$0xff] %v896
  %945 = vst [vmem:[%s13 + $0x30] sm:$0xff] %v901
  %946 = vst [vmem:[%s13 + $0x38] sm:$0xff] %v904
  %947 = vst [vmem:[%s13 + $0x40] sm:$0xff] %v909
  %948 = vst [vmem:[%s13 + $0x48] sm:$0xff] %v912
  %949 = vst [vmem:[%s13 + $0x50] sm:$0xff] %v917
  %950 = vst [vmem:[%s13 + $0x58] sm:$0xff] %v920
  %951 = vst [vmem:[%s13 + $0x60] sm:$0xff] %v925
  %952 = vst [vmem:[%s13 + $0x68] sm:$0xff] %v928
  %953 = vst [vmem:[%s13 + $0x70] sm:$0xff] %v933
  %954 = vst [vmem:[%s13 + $0x78] sm:$0xff] %v936
  %v955 = vld [vmem:[%s8] sm:$0xf]
  %v956 = vld [vmem:[%s8 + $0x4] sm:$0xf]
  %v957 = vld [vmem:[%s8 + $0x8] sm:$0xf]
  %v958 = vld [vmem:[%s8 + $0xc] sm:$0xf]
  %v959 = vld [vmem:[%s8 + $0x10] sm:$0xf]
  %v960 = vld [vmem:[%s8 + $0x14] sm:$0xf]
  %v961 = vld [vmem:[%s8 + $0x18] sm:$0xf]
  %v962 = vld [vmem:[%s8 + $0x1c] sm:$0xf]
  %v963 = vld [vmem:[%s8 + $0x20] sm:$0xf]
  %v964 = vld [vmem:[%s8 + $0x24] sm:$0xf]
  %v965 = vld [vmem:[%s8 + $0x28] sm:$0xf]
  %v966 = vld [vmem:[%s8 + $0x2c] sm:$0xf]
  %v967 = vld [vmem:[%s8 + $0x30] sm:$0xf]
  %v968 = vld [vmem:[%s8 + $0x34] sm:$0xf]
  %v969 = vld [vmem:[%s8 + $0x38] sm:$0xf]
  %v970 = vld [vmem:[%s8 + $0x3c] sm:$0xf]
  %v971 = vld [vmem:[%s11] sm:$0x1]
  %v973 = vlaneseq
  %v974 = vshrl.u32 %v973, 7
  %v975 = vsub.s32 0, %v974
  %v976 = vrot.slane %v971, %v975
  %v994 = vunpack.c.l.b16 %v955
  %v995 = vunpack.c.l.b16 %v956
  %v996 = vunpack.c.l.b16 %v957
  %v997 = vunpack.c.l.b16 %v958
  %v998 = vunpack.c.l.b16 %v959
  %v999 = vunpack.c.l.b16 %v960
  %v1000 = vunpack.c.l.b16 %v961
  %v1001 = vunpack.c.l.b16 %v962
  %v1002 = vunpack.c.l.b16 %v963
  %v1003 = vunpack.c.l.b16 %v964
  %v1004 = vunpack.c.l.b16 %v965
  %v1005 = vunpack.c.l.b16 %v966
  %v1006 = vunpack.c.l.b16 %v967
  %v1007 = vunpack.c.l.b16 %v968
  %v1008 = vunpack.c.l.b16 %v969
  %v1009 = vunpack.c.l.b16 %v970
  %v1010 = vpack.c.b16 %v995, %v994
  %v1011 = vpack.c.b16 %v997, %v996
  %v1012 = vpack.c.b16 %v999, %v998
  %v1013 = vpack.c.b16 %v1001, %v1000
  %v1014 = vpack.c.b16 %v1003, %v1002
  %v1015 = vpack.c.b16 %v1005, %v1004
  %v1016 = vpack.c.b16 %v1007, %v1006
  %v1017 = vpack.c.b16 %v1009, %v1008
  %1026 = vmatprep.subr.bf16.mxu0 0
  %1027 = vmatpush1.bf16.msra.mxu0 %v1010
  %1028 = vmatprep.subr.bf16.mxu0 0
  %1029 = vmatpush1.bf16.msra.mxu0 %v1011
  %1030 = vmatprep.subr.bf16.mxu0 0
  %1031 = vmatpush1.bf16.msra.mxu0 %v1012
  %1032 = vmatprep.subr.bf16.mxu0 0
  %1033 = vmatpush1.bf16.msra.mxu0 %v1013
  %1034 = vmatprep.subr.bf16.mxu0 0
  %1035 = vmatpush1.bf16.msra.mxu0 %v1014
  %1036 = vmatprep.subr.bf16.mxu0 0
  %1037 = vmatpush1.bf16.msra.mxu0 %v1015
  %1038 = vmatprep.subr.bf16.mxu0 0
  %1039 = vmatpush1.bf16.msra.mxu0 %v1016
  %1040 = vmatprep.subr.bf16.mxu0 0
  %1041 = vmatpush1.bf16.msra.mxu0 %v1017
  %1042 = vmatprep.subr.bf16.mxu0 0
  %1043 = vmatpush1.bf16.msra.mxu0 0
  %1044 = vmatprep.subr.bf16.mxu0 0
  %1045 = vmatpush1.bf16.msra.mxu0 0
  %1046 = vmatprep.subr.bf16.mxu0 0
  %1047 = vmatpush1.bf16.msra.mxu0 0
  %1048 = vmatprep.subr.bf16.mxu0 0
  %1049 = vmatpush1.bf16.msra.mxu0 0
  %1050 = vmatprep.subr.bf16.mxu0 0
  %1051 = vmatpush1.bf16.msra.mxu0 0
  %1052 = vmatprep.subr.bf16.mxu0 0
  %1053 = vmatpush1.bf16.msra.mxu0 0
  %1054 = vmatprep.subr.bf16.mxu0 0
  %1055 = vmatpush1.bf16.msra.mxu0 0
  %1056 = vmatprep.subr.bf16.mxu0 0
  %1057 = vmatpush1.bf16.msra.mxu0 0
  %1058 = vmatprep.mubr.bf16.mxu0 0
  %1059 = vmatmul.mubr.bf16.gmra.mrb[0].mxu0 %v763
  %v1060 = vpop.f32.mrb[0].mxu0
  %v1061 = vadd.f32 %v976, %v1060
  %v1062 = vpop.f32.mrb[0].mxu0
  %v1063 = vpop.f32.mrb[0].mxu0
  %v1064 = vadd.f32 %v976, %v1063
  %v1065 = vpop.f32.mrb[0].mxu0
  %1066 = vmatprep.mubr.bf16.mxu0 0
  %1067 = vmatmul.mubr.bf16.gmra.mrb[0].mxu0 %v764
  %v1068 = vpop.f32.mrb[0].mxu0
  %v1069 = vadd.f32 %v976, %v1068
  %v1070 = vpop.f32.mrb[0].mxu0
  %v1071 = vpop.f32.mrb[0].mxu0
  %v1072 = vadd.f32 %v976, %v1071
  %v1073 = vpop.f32.mrb[0].mxu0
  %1074 = vmatprep.mubr.bf16.mxu0 0
  %1075 = vmatmul.mubr.bf16.gmra.mrb[0].mxu0 %v765
  %v1076 = vpop.f32.mrb[0].mxu0
  %v1077 = vadd.f32 %v976, %v1076
  %v1078 = vpop.f32.mrb[0].mxu0
  %v1079 = vpop.f32.mrb[0].mxu0
  %v1080 = vadd.f32 %v976, %v1079
  %v1081 = vpop.f32.mrb[0].mxu0
  %1082 = vmatprep.mubr.bf16.mxu0 0
  %1083 = vmatmul.mubr.bf16.gmra.mrb[0].mxu0 %v766
  %v1084 = vpop.f32.mrb[0].mxu0
  %v1085 = vadd.f32 %v976, %v1084
  %v1086 = vpop.f32.mrb[0].mxu0
  %v1087 = vpop.f32.mrb[0].mxu0
  %v1088 = vadd.f32 %v976, %v1087
  %v1089 = vpop.f32.mrb[0].mxu0
  %1090 = vmatprep.mubr.bf16.mxu0 0
  %1091 = vmatmul.mubr.bf16.gmra.mrb[0].mxu0 %v767
  %v1092 = vpop.f32.mrb[0].mxu0
  %v1093 = vadd.f32 %v976, %v1092
  %v1094 = vpop.f32.mrb[0].mxu0
  %v1095 = vpop.f32.mrb[0].mxu0
  %v1096 = vadd.f32 %v976, %v1095
  %v1097 = vpop.f32.mrb[0].mxu0
  %1098 = vmatprep.mubr.bf16.mxu0 0
  %1099 = vmatmul.mubr.bf16.gmra.mrb[0].mxu0 %v768
  %v1100 = vpop.f32.mrb[0].mxu0
  %v1101 = vadd.f32 %v976, %v1100
  %v1102 = vpop.f32.mrb[0].mxu0
  %v1103 = vpop.f32.mrb[0].mxu0
  %v1104 = vadd.f32 %v976, %v1103
  %v1105 = vpop.f32.mrb[0].mxu0
  %1106 = vmatprep.mubr.bf16.mxu0 0
  %1107 = vmatmul.mubr.bf16.gmra.mrb[0].mxu0 %v769
  %v1108 = vpop.f32.mrb[0].mxu0
  %v1109 = vadd.f32 %v976, %v1108
  %v1110 = vpop.f32.mrb[0].mxu0
  %v1111 = vpop.f32.mrb[0].mxu0
  %v1112 = vadd.f32 %v976, %v1111
  %v1113 = vpop.f32.mrb[0].mxu0
  %1114 = vmatprep.mubr.bf16.mxu0 0
  %1115 = vmatmul.mubr.bf16.gmra.mrb[0].mxu0 %v770
  %v1116 = vpop.f32.mrb[0].mxu0
  %v1117 = vadd.f32 %v976, %v1116
  %v1118 = vpop.f32.mrb[0].mxu0
  %v1119 = vpop.f32.mrb[0].mxu0
  %v1120 = vadd.f32 %v976, %v1119
  %v1121 = vpop.f32.mrb[0].mxu0
  %1122 = vdwg.mxu0
  %1123 = vst.msk [vmem:[%s14] sm:$0xff] %vm168, %v1061
  %1124 = vst.msk [vmem:[%s14 + $0x8] sm:$0xff] %vm168, %v1064
  %1125 = vst.msk [vmem:[%s14 + $0x10] sm:$0xff] %vm168, %v1069
  %1126 = vst.msk [vmem:[%s14 + $0x18] sm:$0xff] %vm168, %v1072
  %1127 = vst.msk [vmem:[%s14 + $0x20] sm:$0xff] %vm168, %v1077
  %1128 = vst.msk [vmem:[%s14 + $0x28] sm:$0xff] %vm168, %v1080
  %1129 = vst.msk [vmem:[%s14 + $0x30] sm:$0xff] %vm168, %v1085
  %1130 = vst.msk [vmem:[%s14 + $0x38] sm:$0xff] %vm168, %v1088
  %1131 = vst.msk [vmem:[%s14 + $0x40] sm:$0xff] %vm168, %v1093
  %1132 = vst.msk [vmem:[%s14 + $0x48] sm:$0xff] %vm168, %v1096
  %1133 = vst.msk [vmem:[%s14 + $0x50] sm:$0xff] %vm168, %v1101
  %1134 = vst.msk [vmem:[%s14 + $0x58] sm:$0xff] %vm168, %v1104
  %1135 = vst.msk [vmem:[%s14 + $0x60] sm:$0xff] %vm168, %v1109
  %1136 = vst.msk [vmem:[%s14 + $0x68] sm:$0xff] %vm168, %v1112
  %1137 = vst.msk [vmem:[%s14 + $0x70] sm:$0xff] %vm168, %v1117
  %1138 = vst.msk [vmem:[%s14 + $0x78] sm:$0xff] %vm168, %v1120
  %v1139 = vld [vmem:[%s9] sm:$0xf]
  %v1140 = vld [vmem:[%s9 + $0x4] sm:$0xf]
  %v1141 = vld [vmem:[%s9 + $0x8] sm:$0xf]
  %v1142 = vld [vmem:[%s9 + $0xc] sm:$0xf]
  %v1143 = vld [vmem:[%s9 + $0x10] sm:$0xf]
  %v1144 = vld [vmem:[%s9 + $0x14] sm:$0xf]
  %v1145 = vld [vmem:[%s9 + $0x18] sm:$0xf]
  %v1146 = vld [vmem:[%s9 + $0x1c] sm:$0xf]
  %v1147 = vld [vmem:[%s9 + $0x20] sm:$0xf]
  %v1148 = vld [vmem:[%s9 + $0x24] sm:$0xf]
  %v1149 = vld [vmem:[%s9 + $0x28] sm:$0xf]
  %v1150 = vld [vmem:[%s9 + $0x2c] sm:$0xf]
  %v1151 = vld [vmem:[%s9 + $0x30] sm:$0xf]
  %v1152 = vld [vmem:[%s9 + $0x34] sm:$0xf]
  %v1153 = vld [vmem:[%s9 + $0x38] sm:$0xf]
  %v1154 = vld [vmem:[%s9 + $0x3c] sm:$0xf]
  %v1155 = vld [vmem:[%s12] sm:$0x1]
  %v1157 = vlaneseq
  %v1158 = vshrl.u32 %v1157, 7
  %v1159 = vsub.s32 0, %v1158
  %v1160 = vrot.slane %v1155, %v1159
  %v1178 = vunpack.c.l.b16 %v1139
  %v1179 = vunpack.c.l.b16 %v1140
  %v1180 = vunpack.c.l.b16 %v1141
  %v1181 = vunpack.c.l.b16 %v1142
  %v1182 = vunpack.c.l.b16 %v1143
  %v1183 = vunpack.c.l.b16 %v1144
  %v1184 = vunpack.c.l.b16 %v1145
  %v1185 = vunpack.c.l.b16 %v1146
  %v1186 = vunpack.c.l.b16 %v1147
  %v1187 = vunpack.c.l.b16 %v1148
  %v1188 = vunpack.c.l.b16 %v1149
  %v1189 = vunpack.c.l.b16 %v1150
  %v1190 = vunpack.c.l.b16 %v1151
  %v1191 = vunpack.c.l.b16 %v1152
  %v1192 = vunpack.c.l.b16 %v1153
  %v1193 = vunpack.c.l.b16 %v1154
  %v1194 = vpack.c.b16 %v1179, %v1178
  %v1195 = vpack.c.b16 %v1181, %v1180
  %v1196 = vpack.c.b16 %v1183, %v1182
  %v1197 = vpack.c.b16 %v1185, %v1184
  %v1198 = vpack.c.b16 %v1187, %v1186
  %v1199 = vpack.c.b16 %v1189, %v1188
  %v1200 = vpack.c.b16 %v1191, %v1190
  %v1201 = vpack.c.b16 %v1193, %v1192
  %1210 = vmatprep.subr.bf16.mxu0 0
  %1211 = vmatpush1.bf16.msra.mxu0 %v1194
  %1212 = vmatprep.subr.bf16.mxu0 0
  %1213 = vmatpush1.bf16.msra.mxu0 %v1195
  %1214 = vmatprep.subr.bf16.mxu0 0
  %1215 = vmatpush1.bf16.msra.mxu0 %v1196
  %1216 = vmatprep.subr.bf16.mxu0 0
  %1217 = vmatpush1.bf16.msra.mxu0 %v1197
  %1218 = vmatprep.subr.bf16.mxu0 0
  %1219 = vmatpush1.bf16.msra.mxu0 %v1198
  %1220 = vmatprep.subr.bf16.mxu0 0
  %1221 = vmatpush1.bf16.msra.mxu0 %v1199
  %1222 = vmatprep.subr.bf16.mxu0 0
  %1223 = vmatpush1.bf16.msra.mxu0 %v1200
  %1224 = vmatprep.subr.bf16.mxu0 0
  %1225 = vmatpush1.bf16.msra.mxu0 %v1201
  %1226 = vmatprep.subr.bf16.mxu0 0
  %1227 = vmatpush1.bf16.msra.mxu0 0
  %1228 = vmatprep.subr.bf16.mxu0 0
  %1229 = vmatpush1.bf16.msra.mxu0 0
  %1230 = vmatprep.subr.bf16.mxu0 0
  %1231 = vmatpush1.bf16.msra.mxu0 0
  %1232 = vmatprep.subr.bf16.mxu0 0
  %1233 = vmatpush1.bf16.msra.mxu0 0
  %1234 = vmatprep.subr.bf16.mxu0 0
  %1235 = vmatpush1.bf16.msra.mxu0 0
  %1236 = vmatprep.subr.bf16.mxu0 0
  %1237 = vmatpush1.bf16.msra.mxu0 0
  %1238 = vmatprep.subr.bf16.mxu0 0
  %1239 = vmatpush1.bf16.msra.mxu0 0
  %1240 = vmatprep.subr.bf16.mxu0 0
  %1241 = vmatpush1.bf16.msra.mxu0 0
  %1242 = vmatprep.mubr.bf16.mxu0 0
  %1243 = vmatmul.mubr.bf16.gmra.mrb[0].mxu0 %v763
  %v1244 = vpop.f32.mrb[0].mxu0
  %v1245 = vadd.f32 %v1160, %v1244
  %v1246 = vpop.f32.mrb[0].mxu0
  %v1247 = vpop.f32.mrb[0].mxu0
  %v1248 = vadd.f32 %v1160, %v1247
  %v1249 = vpop.f32.mrb[0].mxu0
  %1250 = vmatprep.mubr.bf16.mxu0 0
  %1251 = vmatmul.mubr.bf16.gmra.mrb[0].mxu0 %v764
  %v1252 = vpop.f32.mrb[0].mxu0
  %v1253 = vadd.f32 %v1160, %v1252
  %v1254 = vpop.f32.mrb[0].mxu0
  %v1255 = vpop.f32.mrb[0].mxu0
  %v1256 = vadd.f32 %v1160, %v1255
  %v1257 = vpop.f32.mrb[0].mxu0
  %1258 = vmatprep.mubr.bf16.mxu0 0
  %1259 = vmatmul.mubr.bf16.gmra.mrb[0].mxu0 %v765
  %v1260 = vpop.f32.mrb[0].mxu0
  %v1261 = vadd.f32 %v1160, %v1260
  %v1262 = vpop.f32.mrb[0].mxu0
  %v1263 = vpop.f32.mrb[0].mxu0
  %v1264 = vadd.f32 %v1160, %v1263
  %v1265 = vpop.f32.mrb[0].mxu0
  %1266 = vmatprep.mubr.bf16.mxu0 0
  %1267 = vmatmul.mubr.bf16.gmra.mrb[0].mxu0 %v766
  %v1268 = vpop.f32.mrb[0].mxu0
  %v1269 = vadd.f32 %v1160, %v1268
  %v1270 = vpop.f32.mrb[0].mxu0
  %v1271 = vpop.f32.mrb[0].mxu0
  %v1272 = vadd.f32 %v1160, %v1271
  %v1273 = vpop.f32.mrb[0].mxu0
  %1274 = vmatprep.mubr.bf16.mxu0 0
  %1275 = vmatmul.mubr.bf16.gmra.mrb[0].mxu0 %v767
  %v1276 = vpop.f32.mrb[0].mxu0
  %v1277 = vadd.f32 %v1160, %v1276
  %v1278 = vpop.f32.mrb[0].mxu0
  %v1279 = vpop.f32.mrb[0].mxu0
  %v1280 = vadd.f32 %v1160, %v1279
  %v1281 = vpop.f32.mrb[0].mxu0
  %1282 = vmatprep.mubr.bf16.mxu0 0
  %1283 = vmatmul.mubr.bf16.gmra.mrb[0].mxu0 %v768
  %v1284 = vpop.f32.mrb[0].mxu0
  %v1285 = vadd.f32 %v1160, %v1284
  %v1286 = vpop.f32.mrb[0].mxu0
  %v1287 = vpop.f32.mrb[0].mxu0
  %v1288 = vadd.f32 %v1160, %v1287
  %v1289 = vpop.f32.mrb[0].mxu0
  %1290 = vmatprep.mubr.bf16.mxu0 0
  %1291 = vmatmul.mubr.bf16.gmra.mrb[0].mxu0 %v769
  %v1292 = vpop.f32.mrb[0].mxu0
  %v1293 = vadd.f32 %v1160, %v1292
  %v1294 = vpop.f32.mrb[0].mxu0
  %v1295 = vpop.f32.mrb[0].mxu0
  %v1296 = vadd.f32 %v1160, %v1295
  %v1297 = vpop.f32.mrb[0].mxu0
  %1298 = vmatprep.mubr.bf16.mxu0 0
  %1299 = vmatmul.mubr.bf16.gmra.mrb[0].mxu0 %v770
  %v1300 = vpop.f32.mrb[0].mxu0
  %v1301 = vadd.f32 %v1160, %v1300
  %v1302 = vpop.f32.mrb[0].mxu0
  %v1303 = vpop.f32.mrb[0].mxu0
  %v1304 = vadd.f32 %v1160, %v1303
  %v1305 = vpop.f32.mrb[0].mxu0
  %1306 = vdwg.mxu0
  %1307 = vst [vmem:[%s15] sm:$0xff] %v1245
  %1308 = vst [vmem:[%s15 + $0x8] sm:$0xff] %v1248
  %1309 = vst [vmem:[%s15 + $0x10] sm:$0xff] %v1253
  %1310 = vst [vmem:[%s15 + $0x18] sm:$0xff] %v1256
  %1311 = vst [vmem:[%s15 + $0x20] sm:$0xff] %v1261
  %1312 = vst [vmem:[%s15 + $0x28] sm:$0xff] %v1264
  %1313 = vst [vmem:[%s15 + $0x30] sm:$0xff] %v1269
  %1314 = vst [vmem:[%s15 + $0x38] sm:$0xff] %v1272
  %1315 = vst [vmem:[%s15 + $0x40] sm:$0xff] %v1277
  %1316 = vst [vmem:[%s15 + $0x48] sm:$0xff] %v1280
  %1317 = vst [vmem:[%s15 + $0x50] sm:$0xff] %v1285
  %1318 = vst [vmem:[%s15 + $0x58] sm:$0xff] %v1288
  %1319 = vst [vmem:[%s15 + $0x60] sm:$0xff] %v1293
  %1320 = vst [vmem:[%s15 + $0x68] sm:$0xff] %v1296
  %1321 = vst [vmem:[%s15 + $0x70] sm:$0xff] %v1301
  %1322 = vst [vmem:[%s15 + $0x78] sm:$0xff] %v1304
  // Predicated region
  $region54: #{gcn_unit_forward.1} parent=0 // pred_check
    _
  $region55: #{gcn_unit_forward.1} parent=0 // pred_check_branch
    %1324 = sbr.rel (0) target = $region57
  $region56: #{gcn_unit_forward.1} parent=0 // pred_region
    _
  $region57: #{gcn_unit_forward.1} parent=0 // pred_fallthru
    _
  // Predicated region
  $region58: #{gcn_unit_forward.1} parent=0 // pred_check
    _
  $region59: #{gcn_unit_forward.1} parent=0 // pred_check_branch
    %1326 = sbr.rel (0) target = $region61
  $region60: #{gcn_unit_forward.1} parent=0 // pred_region
    _
  $region61: #{gcn_unit_forward.1} parent=0 // pred_fallthru
    _
  // Predicated region
  $region62: #{gcn_unit_forward.1} parent=0 // pred_check
    _
  $region63: #{gcn_unit_forward.1} parent=0 // pred_check_branch
    %1328 = sbr.rel (0) target = $region65
  $region64: #{gcn_unit_forward.1} parent=0 // pred_region
    _
  $region65: #{gcn_unit_forward.1} parent=0 // pred_fallthru
    _
  // Predicated region
  $region66: #{gcn_unit_forward.1} parent=0 // pred_check
    _
  $region67: #{gcn_unit_forward.1} parent=0 // pred_check_branch
    %1330 = sbr.rel (0) target = $region69
  $region68: #{gcn_unit_forward.1} parent=0 // pred_region
    _
  $region69: #{gcn_unit_forward.1} parent=0 // pred_fallthru
    _
  // Predicated region
  $region70: #{gcn_unit_forward.1} parent=0 // pred_check
    _
  $region71: #{gcn_unit_forward.1} parent=0 // pred_check_branch
    %1332 = sbr.rel (0) target = $region73
  $region72: #{gcn_unit_forward.1} parent=0 // pred_region
    _
  $region73: #{gcn_unit_forward.1} parent=0 // pred_fallthru
    _
  // Predicated region
  $region74: #{gcn_unit_forward.1} parent=0 // pred_check
    _
  $region75: #{gcn_unit_forward.1} parent=0 // pred_check_branch
    %1334 = sbr.rel (0) target = $region77
  $region76: #{gcn_unit_forward.1} parent=0 // pred_region
    _
  $region77: #{gcn_unit_forward.1} parent=0 // pred_fallthru
    _

</llo_original>
